<compile_context>
chip_gen: v7x
topology: tpu7x:2x2x1
jax: 0.10.0
libtpu: 0.0.40
codegen_flags: <defaults>
</compile_context>

<pallas_src>
import functools
import math

import jax
import jax.numpy as jnp
from jax.experimental import pallas as pl
from jax.experimental.pallas import tpu as pltpu

MASK_VALUE = -1e30  # finite "minus infinity": avoids inf - inf -> NaN on fully-masked rows


# ---------------------------------------------------------------------------
# Kernels
# ---------------------------------------------------------------------------
def _kv_proj_kernel(k_ref, v_ref, wk_ref, bk_ref, wv_ref, bv_ref,
                    kt_ref, vp_ref, *, num_heads, head_size):
    """Project one (TP, E) tile of K and V.

    K is emitted pre-transposed, head-major (H, Dh, TP): lane-dense in the kv
    axis and directly usable as the (Dh, TKV) RHS of the scores matmul.  V is
    emitted head-major (H, TP, Dh) for the PV matmul.
    """
    xk = k_ref[0].astype(jnp.bfloat16)
    xv = v_ref[0].astype(jnp.bfloat16)
    kp = jnp.dot(xk, wk_ref[...], preferred_element_type=jnp.float32) + bk_ref[...]
    vp = jnp.dot(xv, wv_ref[...], preferred_element_type=jnp.float32) + bv_ref[...]
    t = kp.shape[0]
    kt_ref[0] = (kp.reshape(t, num_heads, head_size)
                   .transpose(1, 2, 0).astype(jnp.bfloat16))          # (H, Dh, TP)
    vp_ref[0] = (vp.reshape(t, num_heads, head_size)
                   .transpose(1, 0, 2).astype(jnp.bfloat16))          # (H, TP, Dh)


def _flash_attn_kernel(q_ref, kt_ref, v_ref, *rest,
                       num_heads, head_size, tq, tkv, causal, mask_mode):
    """Flash attention over grid (B, nq, nkv) with fused Q and O projections."""
    if mask_mode == "none":
        (wq_ref, bq_ref, wo_ref, bo_ref,
         out_ref, q_s, m_s, l_s, acc_s) = rest
        bias_ref = None
    else:
        (bias_ref, wq_ref, bq_ref, wo_ref, bo_ref,
         out_ref, q_s, m_s, l_s, acc_s) = rest

    i = pl.program_id(1)
    j = pl.program_id(2)

    @pl.when(j == 0)
    def _init():
        # Fused Q projection + 1/sqrt(Dh) scaling, once per query tile.
        xq = q_ref[0].astype(jnp.bfloat16)                               # (TQ, E)
        qp = jnp.dot(xq, wq_ref[...], preferred_element_type=jnp.float32)
        qp = (qp + bq_ref[...]) * (1.0 / math.sqrt(head_size))
        q_s[...] = (qp.reshape(tq, num_heads, head_size)
                      .transpose(1, 0, 2).astype(jnp.bfloat16))          # (H, TQ, Dh)
        m_s[...] = jnp.full_like(m_s, -jnp.inf)
        l_s[...] = jnp.zeros_like(l_s)
        acc_s[...] = jnp.zeros_like(acc_s)

    def _compute():
        # Scores: per-head (TQ, Dh) x (Dh, TKV), bf16 operands, f32 accumulation.
        s = jnp.einsum('hqd,hdk->hqk', q_s[...], kt_ref[0],
                       preferred_element_type=jnp.float32)               # (H, TQ, TKV)
        if mask_mode == "kv":
            s = s + bias_ref[0]                                          # (1, TKV) bcast
        elif mask_mode == "full":
            s = s + bias_ref[...]                                        # (1, TQ, TKV) bcast
        if causal:
            q_pos = i * tq + jax.lax.broadcasted_iota(jnp.int32, (1, tq, tkv), 1)
            k_pos = j * tkv + jax.lax.broadcasted_iota(jnp.int32, (1, tq, tkv), 2)
            s = jnp.where(k_pos <= q_pos, s, MASK_VALUE)

        # Online softmax update.
        m_prev = m_s[...]
        m_new = jnp.maximum(m_prev, jnp.max(s, axis=-1, keepdims=True))
        alpha = jnp.exp(m_prev - m_new)
        p = jnp.exp(s - m_new)
        l_s[...] = alpha * l_s[...] + jnp.sum(p, axis=-1, keepdims=True)
        acc_s[...] = alpha * acc_s[...] + jnp.einsum(
            'hqk,hkd->hqd', p.astype(jnp.bfloat16), v_ref[0],
            preferred_element_type=jnp.float32)
        m_s[...] = m_new

    if causal:
        # Skip kv tiles that lie entirely above the diagonal.
        pl.when(j * tkv < (i + 1) * tq)(_compute)
    else:
        _compute()

    @pl.when(j == pl.num_programs(2) - 1)
    def _finalize():
        ctx = acc_s[...] * pl.reciprocal(l_s[...], approx=False)         # (H, TQ, Dh)
        h, t, dh = ctx.shape
        ctx2 = ctx.transpose(1, 0, 2).reshape(t, h * dh)                 # one relayout / q-tile
        o = jnp.dot(ctx2.astype(jnp.bfloat16), wo_ref[...],
                    preferred_element_type=jnp.float32) + bo_ref[...]
        out_ref[0] = o.astype(out_ref.dtype)


# ---------------------------------------------------------------------------
# Wrapper helpers
# ---------------------------------------------------------------------------
def _nbytes(shape, dtype):
    return math.prod(shape) * jnp.dtype(dtype).itemsize


def _phys_vmem_bytes():
    try:
        cap = getattr(pltpu.get_tpu_info(), "vmem_capacity_bytes", None)
        if cap:
            return int(cap)
    except Exception:
        pass
    return 128 * 2**20  # conservative default if hw query unavailable


def _pad_seq(s):
    return s if s <= 128 else ((s + 127) // 128) * 128


def _seq_tiles(s):
    cands = [t for t in (512, 256, 128) if s % t == 0]
    return cands if cands else [s]


def _kernel2_vmem_bytes(tq, tkv, E, H, Dh, w_copies, mask_mode):
    est = 2 * _nbytes((tq, E), jnp.float32)                  # q block (double-buffered)
    est += 2 * 2 * _nbytes((E, tkv), jnp.bfloat16)           # K^T + V blocks
    est += 2 * _nbytes((tq, E), jnp.float32)                 # out block
    est += w_copies * (2 * _nbytes((E, E), jnp.bfloat16)
                       + 2 * _nbytes((8, E), jnp.float32))   # wq/wo + bq/bo (sublane-padded)
    if mask_mode == "kv":
        est += 2 * _nbytes((8, tkv), jnp.float32)
    elif mask_mode == "full":
        est += 2 * _nbytes((tq, tkv), jnp.float32)
    est += _nbytes((H, tq, Dh), jnp.bfloat16)                # q_s
    est += 2 * _nbytes((H, tq, 128), jnp.float32)            # m_s + l_s (lane-padded to 128)
    est += _nbytes((H, tq, Dh), jnp.float32)                 # acc_s
    est += 2 * _nbytes((H, tq, tkv), jnp.float32)            # in-kernel score / p intermediates
    return est


def _kernel1_vmem_bytes(tp, E, w_copies):
    est = 2 * 2 * _nbytes((tp, E), jnp.float32)              # k, v input blocks
    est += 2 * 2 * _nbytes((tp, E), jnp.bfloat16)            # K^T, V output blocks
    est += w_copies * (2 * _nbytes((E, E), jnp.bfloat16)
                       + 2 * _nbytes((8, E), jnp.float32))
    est += 2 * _nbytes((tp, E), jnp.float32)                 # projection intermediates
    return est


def _choose_tiles(sq_p, skv_p, E, H, Dh, w_copies, mask_mode, phys_vmem):
    budget = max(int(0.4 * phys_vmem), 24 * 2**20)
    tq_cands = _seq_tiles(sq_p)
    tkv_cands = []
    for t in [skv_p] + [t for t in (512, 256, 128) if skv_p % t == 0]:
        if t not in tkv_cands:
            tkv_cands.append(t)      # prefer full-Skv KV residency, then large tiles
    for tkv in tkv_cands:
        for tq in tq_cands:
            if _kernel2_vmem_bytes(tq, tkv, E, H, Dh, w_copies, mask_mode) <= budget:
                return tq, tkv
    return tq_cands[-1], tkv_cands[-1]


def _vmem_limit(est_bytes, phys_vmem):
    cap = int(0.75 * phys_vmem)      # clamp to the actual chip (v7x = 64 MiB) not a fixed 96 MiB
    return int(min(max(32 * 2**20, int(1.3 * est_bytes)), cap))


def _const_spec(shape, single_buffer):
    idx = lambda *args: (0,) * len(shape)
    if single_buffer:
        # Constant index_map -> never re-fetched; 1 buffer instead of the default 2.
        return pl.BlockSpec(shape, idx, pipeline_mode=pl.Buffered(1))
    return pl.BlockSpec(shape, idx)


@functools.lru_cache(maxsize=None)
def _buffered_one_supported():
    """Narrow, cached capability probe for pl.Buffered(1) single-buffered specs."""
    try:
        def _probe_kernel(x_ref, w_ref, o_ref):
            o_ref[...] = x_ref[...] + w_ref[...]
        fn = pl.pallas_call(
            _probe_kernel,
            out_shape=jax.ShapeDtypeStruct((16, 128), jnp.float32),
            grid=(2,),
            in_specs=[pl.BlockSpec((8, 128), lambda i: (i, 0)),
                      pl.BlockSpec((8, 128), lambda i: (0, 0),
                                   pipeline_mode=pl.Buffered(1))],
            out_specs=pl.BlockSpec((8, 128), lambda i: (i, 0)),
        )
        jax.block_until_ready(fn(jnp.zeros((16, 128), jnp.float32),
                                 jnp.zeros((8, 128), jnp.float32)))
        return True
    except Exception:
        return False


# ---------------------------------------------------------------------------
# Forward
# ---------------------------------------------------------------------------
def _mha(k, v, q, params, *, num_heads, mask, causal, single_buffer_weights):
    B, Sq, E = q.shape
    Skv = k.shape[1]
    assert E % num_heads == 0
    Dh = E // num_heads
    f32, bf16 = jnp.float32, jnp.bfloat16
    phys_vmem = _phys_vmem_bytes()
    w_copies = 1 if single_buffer_weights else 2

    # Pre-cast matmul weights to bf16 once (halves DMA + VMEM); biases stay f32.
    wq, wk, wv, wo = (params[n].astype(bf16) for n in ('wq', 'wk', 'wv', 'wo'))
    bq, bk, bv, bo = (params[n].astype(f32) for n in ('bq', 'bk', 'bv', 'bo'))

    # Pad sequence lengths to multiples of 128 (keeps blocks (8,128)-aligned and
    # pipelined for irregular lengths); padded keys are masked, padded query rows sliced off.
    Sq_p, Skv_p = _pad_seq(Sq), _pad_seq(Skv)
    if Sq_p != Sq:
        q = jnp.pad(q, ((0, 0), (0, Sq_p - Sq), (0, 0)))
    if Skv_p != Skv:
        k = jnp.pad(k, ((0, 0), (0, Skv_p - Skv), (0, 0)))
        v = jnp.pad(v, ((0, 0), (0, Skv_p - Skv), (0, 0)))

    # ---- mask handling: no dense (B, Sq, Skv) bias unless genuinely per-query ----
    need_pad_mask = Skv_p != Skv
    if mask is not None:
        m = jnp.asarray(mask, jnp.bool_)
        if m.ndim == 1:
            m = m[None, None, :]
        elif m.ndim == 2:
            m = m[None, :, :]
        per_query = m.shape[1] != 1
    else:
        m = None
        per_query = False

    if m is None and not need_pad_mask:
        mask_mode, bias = "none", None
    elif not per_query:
        mask_mode = "kv"
        keep = (jnp.broadcast_to(m[:, 0, :], (B, Skv)) if m is not None
                else jnp.ones((B, Skv), jnp.bool_))
        keep = jnp.pad(keep, ((0, 0), (0, Skv_p - Skv)), constant_values=False)
        bias = jnp.where(keep, 0.0, MASK_VALUE).astype(f32)[:, None, :]   # (B, 1, Skv_p)
    else:
        # TODO(synk): genuinely per-query masks still use a dense additive bias (rare path).
        mask_mode = "full"
        keep = jnp.broadcast_to(m, (B, Sq, Skv))
        bias = jnp.where(keep, 0.0, MASK_VALUE).astype(f32)
        bias = jnp.pad(bias, ((0, 0), (0, Sq_p - Sq), (0, Skv_p - Skv)),
                       constant_values=MASK_VALUE)                        # (B, Sq_p, Skv_p)

    TQ, TKV = _choose_tiles(Sq_p, Skv_p, E, num_heads, Dh, w_copies, mask_mode, phys_vmem)
    nq, nkv = Sq_p // TQ, Skv_p // TKV
    TP = next((t for t in (256, 128) if Skv_p % t == 0), Skv_p)
    np_ = Skv_p // TP

    # ---- kernel 1: K/V projection into head-major bf16 (K pre-transposed) ----
    k1_est = _kernel1_vmem_bytes(TP, E, w_copies)
    k1_cost = pl.CostEstimate(
        flops=int(4 * B * Skv_p * E * E),
        transcendentals=0,
        bytes_accessed=int(2 * B * Skv_p * E * 4 + 2 * (E * E * 2 + E * 4)
                           + 2 * B * Skv_p * E * 2))

    kv_proj = pl.pallas_call(
        functools.partial(_kv_proj_kernel, num_heads=num_heads, head_size=Dh),
        out_shape=(jax.ShapeDtypeStruct((B, num_heads, Dh, Skv_p), bf16),   # K^T
                   jax.ShapeDtypeStruct((B, num_heads, Skv_p, Dh), bf16)),  # V
        grid_spec=pltpu.PrefetchScalarGridSpec(
            num_scalar_prefetch=0,
            grid=(B, np_),
            in_specs=[
                pl.BlockSpec((1, TP, E), lambda b, t: (b, t, 0)),    # k
                pl.BlockSpec((1, TP, E), lambda b, t: (b, t, 0)),    # v
                _const_spec((E, E), single_buffer_weights),          # wk
                _const_spec((1, E), single_buffer_weights),          # bk
                _const_spec((E, E), single_buffer_weights),          # wv
                _const_spec((1, E), single_buffer_weights),          # bv
            ],
            out_specs=[
                pl.BlockSpec((1, num_heads, Dh, TP), lambda b, t: (b, 0, 0, t)),
                pl.BlockSpec((1, num_heads, TP, Dh), lambda b, t: (b, 0, t, 0)),
            ],
        ),
        compiler_params=pltpu.CompilerParams(
            dimension_semantics=("parallel", "parallel"),
            vmem_limit_bytes=_vmem_limit(k1_est, phys_vmem)),
        cost_estimate=k1_cost,
    )
    kt, vp = kv_proj(k, v, wk, bk, wv, bv)

    # ---- kernel 2: flash attention with fused Q / O projections ----
    k2_est = _kernel2_vmem_bytes(TQ, TKV, E, num_heads, Dh, w_copies, mask_mode)
    kv_reread = nq if nkv > 1 else 1
    bias_bytes = 0 if bias is None else int(bias.size) * 4
    k2_cost = pl.CostEstimate(
        flops=int(4 * B * Sq_p * E * E + 4 * B * num_heads * Sq_p * Skv_p * Dh),
        transcendentals=int(B * num_heads * Sq_p * Skv_p),
        bytes_accessed=int(2 * B * Sq_p * E * 4
                           + kv_reread * 2 * B * Skv_p * E * 2
                           + 2 * (E * E * 2 + E * 4) + bias_bytes))

    in_specs = [
        pl.BlockSpec((1, TQ, E), lambda b, i, j: (b, i, 0)),                    # q
        pl.BlockSpec((1, num_heads, Dh, TKV), lambda b, i, j: (b, 0, 0, j)),    # K^T
        pl.BlockSpec((1, num_heads, TKV, Dh), lambda b, i, j: (b, 0, j, 0)),    # V
    ]
    args = [q, kt, vp]
    if mask_mode == "kv":
        in_specs.append(pl.BlockSpec((1, 1, TKV), lambda b, i, j: (b, 0, j)))
        args.append(bias)
    elif mask_mode == "full":
        in_specs.append(pl.BlockSpec((1, TQ, TKV), lambda b, i, j: (b, i, j)))
        args.append(bias)
    in_specs += [
        _const_spec((E, E), single_buffer_weights),   # wq
        _const_spec((1, E), single_buffer_weights),   # bq
        _const_spec((E, E), single_buffer_weights),   # wo
        _const_spec((1, E), single_buffer_weights),   # bo
    ]
    args += [wq, bq, wo, bo]

    flash = pl.pallas_call(
        functools.partial(_flash_attn_kernel, num_heads=num_heads, head_size=Dh,
                          tq=TQ, tkv=TKV, causal=causal, mask_mode=mask_mode),
        out_shape=jax.ShapeDtypeStruct((B, Sq_p, E), q.dtype),
        grid_spec=pltpu.PrefetchScalarGridSpec(
            num_scalar_prefetch=0,
            grid=(B, nq, nkv),   # B*nq parallel work items -> keeps both v7x cores busy
            in_specs=in_specs,
            out_specs=pl.BlockSpec((1, TQ, E), lambda b, i, j: (b, i, 0)),
            scratch_shapes=[
                pltpu.VMEM((num_heads, TQ, Dh), bf16),   # q_s  (scaled, head-major)
                pltpu.VMEM((num_heads, TQ, 1), f32),     # m_s  running max
                pltpu.VMEM((num_heads, TQ, 1), f32),     # l_s  running sum
                pltpu.VMEM((num_heads, TQ, Dh), f32),    # acc_s
            ],
        ),
        compiler_params=pltpu.CompilerParams(
            dimension_semantics=("parallel", "parallel", "arbitrary"),
            vmem_limit_bytes=_vmem_limit(k2_est, phys_vmem)),
        cost_estimate=k2_cost,
    )
    out = flash(*args)
    if Sq_p != Sq:
        out = out[:, :Sq, :]
    return out


def multihead_attention(k, v, q, params, *, num_heads, mask=None, causal=False):
    """Pallas forward of the PyTorch MultiheadAttention module (eval mode).

    k, v, q: (B, S, E) float32.  mask: optional bool broadcastable to (B, Sq, Skv),
    True = attend.  Dropout is identity (eval mode).
    Note: fully-masked query rows produce a uniform average of V (finite -1e30
    masking) instead of the NaN the PyTorch -inf reference produces.
    """
    single = _buffered_one_supported()
    return _mha(k, v, q, params, num_heads=num_heads, mask=mask, causal=causal,
                single_buffer_weights=single)


# ---------------------------------------------------------------------------
# Pure-JAX reference (mirrors the PyTorch forward exactly, eval mode, f32)
# ---------------------------------------------------------------------------
def reference_mha(k, v, q, params, num_heads, mask=None, causal=False):
    B, Sq, E = q.shape
    Skv = k.shape[1]
    Dh = E // num_heads
    kp = k @ params['wk'] + params['bk'][0]
    vp = v @ params['wv'] + params['bv'][0]
    qp = q @ params['wq'] + params['bq'][0]
    kp = kp.reshape(B, Skv, num_heads, Dh).transpose(0, 2, 1, 3)
    vp = vp.reshape(B, Skv, num_heads, Dh).transpose(0, 2, 1, 3)
    qp = qp.reshape(B, Sq, num_heads, Dh).transpose(0, 2, 1, 3) / math.sqrt(Dh)
    s = jnp.einsum('bhqd,bhkd->bhqk', qp, kp)
    m = None if mask is None else jnp.broadcast_to(jnp.asarray(mask, bool), (B, Sq, Skv))
    if causal:
        cm = jnp.broadcast_to(jnp.tril(jnp.ones((Sq, Skv), bool))[None], (B, Sq, Skv))
        m = cm if m is None else jnp.logical_and(m, cm)
    if m is not None:
        s = jnp.where(m[:, None, :, :], s, -jnp.inf)
    a = jax.nn.softmax(s, axis=-1)
    ctx = jnp.einsum('bhqk,bhkd->bhqd', a, vp).transpose(0, 2, 1, 3).reshape(B, Sq, E)
    return ctx @ params['wo'] + params['bo'][0]


if __name__ == "__main__":
    B, S, E, H = 2, 8, 32, 4   # small shapes; head_size = 8

    key = jax.random.PRNGKey(0)
    ks = jax.random.split(key, 16)
    scale = 0.1
    params = {
        # nn.Linear weights stored pre-transposed: y = x @ W + b
        'wq': scale * jax.random.normal(ks[0], (E, E), jnp.float32),
        'bq': scale * jax.random.normal(ks[1], (1, E), jnp.float32),
        'wk': scale * jax.random.normal(ks[2], (E, E), jnp.float32),
        'bk': scale * jax.random.normal(ks[3], (1, E), jnp.float32),
        'wv': scale * jax.random.normal(ks[4], (E, E), jnp.float32),
        'bv': scale * jax.random.normal(ks[5], (1, E), jnp.float32),
        'wo': scale * jax.random.normal(ks[6], (E, E), jnp.float32),
        'bo': scale * jax.random.normal(ks[7], (1, E), jnp.float32),
    }
    q = jax.random.normal(ks[8], (B, S, E), jnp.float32)
    k = jax.random.normal(ks[9], (B, S, E), jnp.float32)
    v = jax.random.normal(ks[10], (B, S, E), jnp.float32)

    # key-padding mask: last two key positions of batch 1 are masked out
    mask = jnp.ones((B, 1, S), jnp.bool_).at[1, 0, S - 2:].set(False)

    # bf16 MXU operands with f32 accumulation -> loosened tolerance
    atol = rtol = 3e-2

    def _check(name, out, ref):
        err = float(jnp.max(jnp.abs(out - ref)))
        assert jnp.allclose(out, ref, atol=atol, rtol=rtol), f"{name} max abs err {err}"

    # 1. key-padding mask, non-causal
    out = jax.block_until_ready(
        multihead_attention(k, v, q, params, num_heads=H, mask=mask))
    _check("masked", out, reference_mha(k, v, q, params, H, mask=mask))

    # 2. key-padding mask, causal (causal mask generated in-kernel from iota)
    out_c = jax.block_until_ready(
        multihead_attention(k, v, q, params, num_heads=H, mask=mask, causal=True))
    _check("causal", out_c, reference_mha(k, v, q, params, H, mask=mask, causal=True))

    # 3. no mask at all (fast path: no bias input, no mask add)
    out_n = jax.block_until_ready(
        multihead_attention(k, v, q, params, num_heads=H))
    _check("nomask", out_n, reference_mha(k, v, q, params, H))

    # 4. irregular sequence length (exercises padding to a multiple of 128)
    S2 = 136
    q2 = jax.random.normal(ks[11], (B, S2, E), jnp.float32)
    k2 = jax.random.normal(ks[12], (B, S2, E), jnp.float32)
    v2 = jax.random.normal(ks[13], (B, S2, E), jnp.float32)
    mask2 = jnp.ones((B, 1, S2), jnp.bool_).at[0, 0, S2 - 5:].set(False)
    out_p = jax.block_until_ready(
        multihead_attention(k2, v2, q2, params, num_heads=H, mask=mask2, causal=True))
    _check("padded", out_p, reference_mha(k2, v2, q2, params, H, mask=mask2, causal=True))

    print("KERNEL_OK")
</pallas_src>

<mosaic_0001>
module attributes {stable_mosaic.version = 11 : i64} {
  func.func @_probe_kernel(%arg0: i32, %arg1: memref<8x128xf32, #tpu.memory_space<vmem>>, %arg2: memref<8x128xf32, #tpu.memory_space<vmem>>, %arg3: memref<8x128xf32, #tpu.memory_space<vmem>>) attributes {dimension_semantics = [#tpu.dimension_semantics<arbitrary>], iteration_bounds = array<i64: 2>, scalar_prefetch = 0 : i64, scratch_operands = 0 : i64, tpu.core_type = #tpu.core_type<tc>, window_params = [{transform_indices = @transform_0, window_bounds = array<i64: 8, 128>}, {pipeline_mode = #tpu.pipeline_mode<synchronous>, transform_indices = @transform_1, window_bounds = array<i64: 8, 128>}, {transform_indices = @transform_2, window_bounds = array<i64: 8, 128>}]} {
    %c0 = arith.constant 0 : index
    %c0_0 = arith.constant 0 : index
    %0 = vector.load %arg1[%c0, %c0_0] : memref<8x128xf32, #tpu.memory_space<vmem>>, vector<8x128xf32>
    %c0_1 = arith.constant 0 : index
    %c0_2 = arith.constant 0 : index
    %1 = vector.load %arg2[%c0_1, %c0_2] : memref<8x128xf32, #tpu.memory_space<vmem>>, vector<8x128xf32>
    %2 = arith.addf %0, %1 : vector<8x128xf32>
    %c0_3 = arith.constant 0 : index
    %c0_4 = arith.constant 0 : index
    %3 = vector.load %arg3[%c0_3, %c0_4] : memref<8x128xf32, #tpu.memory_space<vmem>>, vector<8x128xf32>
    tpu.vector_store %arg3[%c0_3, %c0_4], %2 {strides = array<i32>} : memref<8x128xf32, #tpu.memory_space<vmem>>, vector<8x128xf32>,
    return
  }
  func.func @transform_0(%arg0: i32) -> (i32, i32) {
    %c0_i32 = arith.constant 0 : i32
    %c0_i32_0 = arith.constant 0 : i32
    return %arg0, %c0_i32 : i32, i32
  }
  func.func @transform_1(%arg0: i32) -> (i32, i32) {
    %c0_i32 = arith.constant 0 : i32
    %c0_i32_0 = arith.constant 0 : i32
    %c0_i32_1 = arith.constant 0 : i32
    return %c0_i32, %c0_i32_0 : i32, i32
  }
  func.func @transform_2(%arg0: i32) -> (i32, i32) {
    %c0_i32 = arith.constant 0 : i32
    %c0_i32_0 = arith.constant 0 : i32
    return %arg0, %c0_i32 : i32, i32
  }
}

module attributes {stable_mosaic.version = 11 : i64} {
  func.func @_kv_proj_kernel(%arg0: i32, %arg1: i32, %arg2: memref<1x8x32xf32, #tpu.memory_space<vmem>>, %arg3: memref<1x8x32xf32, #tpu.memory_space<vmem>>, %arg4: memref<32x32xbf16, #tpu.memory_space<vmem>>, %arg5: memref<1x32xf32, #tpu.memory_space<vmem>>, %arg6: memref<32x32xbf16, #tpu.memory_space<vmem>>, %arg7: memref<1x32xf32, #tpu.memory_space<vmem>>, %arg8: memref<1x4x8x8xbf16, #tpu.memory_space<vmem>>, %arg9: memref<1x4x8x8xbf16, #tpu.memory_space<vmem>>) attributes {dimension_semantics = [#tpu.dimension_semantics<parallel>, #tpu.dimension_semantics<parallel>], iteration_bounds = array<i64: 2, 1>, scalar_prefetch = 0 : i64, scratch_operands = 0 : i64, tpu.core_type = #tpu.core_type<tc>, window_params = [{transform_indices = @transform_0, window_bounds = array<i64: 1, 8, 32>}, {transform_indices = @transform_1, window_bounds = array<i64: 1, 8, 32>}, {pipeline_mode = #tpu.pipeline_mode<synchronous>, transform_indices = @transform_2, window_bounds = array<i64: 32, 32>}, {pipeline_mode = #tpu.pipeline_mode<synchronous>, transform_indices = @transform_3, window_bounds = array<i64: 1, 32>}, {pipeline_mode = #tpu.pipeline_mode<synchronous>, transform_indices = @transform_4, window_bounds = array<i64: 32, 32>}, {pipeline_mode = #tpu.pipeline_mode<synchronous>, transform_indices = @transform_5, window_bounds = array<i64: 1, 32>}, {transform_indices = @transform_6, window_bounds = array<i64: 1, 4, 8, 8>}, {transform_indices = @transform_7, window_bounds = array<i64: 1, 4, 8, 8>}]} {
    %c0 = arith.constant 0 : index
    %c0_0 = arith.constant 0 : index
    %c0_1 = arith.constant 0 : index
    %0 = vector.load %arg2[%c0, %c0_0, %c0_1] : memref<1x8x32xf32, #tpu.memory_space<vmem>>, vector<1x8x32xf32>
    %1 = vector.shape_cast %0 : vector<1x8x32xf32> to vector<8x32xf32>
    %2 = arith.truncf %1 : vector<8x32xf32> to vector<8x32xbf16>
    %c0_2 = arith.constant 0 : index
    %c0_3 = arith.constant 0 : index
    %c0_4 = arith.constant 0 : index
    %3 = vector.load %arg3[%c0_2, %c0_3, %c0_4] : memref<1x8x32xf32, #tpu.memory_space<vmem>>, vector<1x8x32xf32>
    %4 = vector.shape_cast %3 : vector<1x8x32xf32> to vector<8x32xf32>
    %5 = arith.truncf %4 : vector<8x32xf32> to vector<8x32xbf16>
    %c0_5 = arith.constant 0 : index
    %c0_6 = arith.constant 0 : index
    %6 = vector.load %arg4[%c0_5, %c0_6] : memref<32x32xbf16, #tpu.memory_space<vmem>>, vector<32x32xbf16>
    %cst = arith.constant dense<0.000000e+00> : vector<8x32xf32>
    %7 = tpu.matmul %2, %6, %cst {dimension_numbers = #tpu.dot_dimension_numbers<[1], [0], [0], [1], [0, 0, 1, 1], [], []>} : vector<8x32xbf16>, vector<32x32xbf16>, vector<8x32xf32> -> vector<8x32xf32>
    %c0_7 = arith.constant 0 : index
    %c0_8 = arith.constant 0 : index
    %8 = vector.load %arg5[%c0_7, %c0_8] : memref<1x32xf32, #tpu.memory_space<vmem>>, vector<1x32xf32>
    %9 = vector.broadcast %8 : vector<1x32xf32> to vector<8x32xf32>
    %10 = arith.addf %7, %9 : vector<8x32xf32>
    %c0_9 = arith.constant 0 : index
    %c0_10 = arith.constant 0 : index
    %11 = vector.load %arg6[%c0_9, %c0_10] : memref<32x32xbf16, #tpu.memory_space<vmem>>, vector<32x32xbf16>
    %cst_11 = arith.constant dense<0.000000e+00> : vector<8x32xf32>
    %12 = tpu.matmul %5, %11, %cst_11 {dimension_numbers = #tpu.dot_dimension_numbers<[1], [0], [0], [1], [0, 0, 1, 1], [], []>} : vector<8x32xbf16>, vector<32x32xbf16>, vector<8x32xf32> -> vector<8x32xf32>
    %c0_12 = arith.constant 0 : index
    %c0_13 = arith.constant 0 : index
    %13 = vector.load %arg7[%c0_12, %c0_13] : memref<1x32xf32, #tpu.memory_space<vmem>>, vector<1x32xf32>
    %14 = vector.broadcast %13 : vector<1x32xf32> to vector<8x32xf32>
    %15 = arith.addf %12, %14 : vector<8x32xf32>
    %16 = vector.shape_cast %10 : vector<8x32xf32> to vector<8x4x8xf32>
    %17 = tpu.transpose %16, [1, 2, 0] : vector<8x4x8xf32> -> vector<4x8x8xf32>
    %18 = arith.truncf %17 : vector<4x8x8xf32> to vector<4x8x8xbf16>
    %c0_14 = arith.constant 0 : index
    %c0_15 = arith.constant 0 : index
    %c0_16 = arith.constant 0 : index
    %c0_17 = arith.constant 0 : index
    %19 = vector.load %arg8[%c0_14, %c0_15, %c0_16, %c0_17] : memref<1x4x8x8xbf16, #tpu.memory_space<vmem>>, vector<1x4x8x8xbf16>
    %20 = vector.shape_cast %19 : vector<1x4x8x8xbf16> to vector<4x8x8xbf16>
    %21 = vector.shape_cast %18 : vector<4x8x8xbf16> to vector<1x4x8x8xbf16>
    tpu.vector_store %arg8[%c0_14, %c0_15, %c0_16, %c0_17], %21 {strides = array<i32>} : memref<1x4x8x8xbf16, #tpu.memory_space<vmem>>, vector<1x4x8x8xbf16>,
    %22 = vector.shape_cast %15 : vector<8x32xf32> to vector<8x4x8xf32>
    %23 = tpu.transpose %22, [1, 0, 2] : vector<8x4x8xf32> -> vector<4x8x8xf32>
    %24 = arith.truncf %23 : vector<4x8x8xf32> to vector<4x8x8xbf16>
    %c0_18 = arith.constant 0 : index
    %c0_19 = arith.constant 0 : index
    %c0_20 = arith.constant 0 : index
    %c0_21 = arith.constant 0 : index
    %25 = vector.load %arg9[%c0_18, %c0_19, %c0_20, %c0_21] : memref<1x4x8x8xbf16, #tpu.memory_space<vmem>>, vector<1x4x8x8xbf16>
    %26 = vector.shape_cast %25 : vector<1x4x8x8xbf16> to vector<4x8x8xbf16>
    %27 = vector.shape_cast %24 : vector<4x8x8xbf16> to vector<1x4x8x8xbf16>
    tpu.vector_store %arg9[%c0_18, %c0_19, %c0_20, %c0_21], %27 {strides = array<i32>} : memref<1x4x8x8xbf16, #tpu.memory_space<vmem>>, vector<1x4x8x8xbf16>,
    return
  }
  func.func @transform_0(%arg0: i32, %arg1: i32) -> (i32, i32, i32) {
    %c0_i32 = arith.constant 0 : i32
    %c0_i32_0 = arith.constant 0 : i32
    return %arg0, %arg1, %c0_i32 : i32, i32, i32
  }
  func.func @transform_1(%arg0: i32, %arg1: i32) -> (i32, i32, i32) {
    %c0_i32 = arith.constant 0 : i32
    %c0_i32_0 = arith.constant 0 : i32
    return %arg0, %arg1, %c0_i32 : i32, i32, i32
  }
  func.func @transform_2(%arg0: i32, %arg1: i32) -> (i32, i32) {
    %c0_i32 = arith.constant 0 : i32
    %c0_i32_0 = arith.constant 0 : i32
    %c0_i32_1 = arith.constant 0 : i32
    return %c0_i32, %c0_i32_0 : i32, i32
  }
  func.func @transform_3(%arg0: i32, %arg1: i32) -> (i32, i32) {
    %c0_i32 = arith.constant 0 : i32
    %c0_i32_0 = arith.constant 0 : i32
    %c0_i32_1 = arith.constant 0 : i32
    return %c0_i32, %c0_i32_0 : i32, i32
  }
  func.func @transform_4(%arg0: i32, %arg1: i32) -> (i32, i32) {
    %c0_i32 = arith.constant 0 : i32
    %c0_i32_0 = arith.constant 0 : i32
    %c0_i32_1 = arith.constant 0 : i32
    return %c0_i32, %c0_i32_0 : i32, i32
  }
  func.func @transform_5(%arg0: i32, %arg1: i32) -> (i32, i32) {
    %c0_i32 = arith.constant 0 : i32
    %c0_i32_0 = arith.constant 0 : i32
    %c0_i32_1 = arith.constant 0 : i32
    return %c0_i32, %c0_i32_0 : i32, i32
  }
  func.func @transform_6(%arg0: i32, %arg1: i32) -> (i32, i32, i32, i32) {
    %c0_i32 = arith.constant 0 : i32
    %c0_i32_0 = arith.constant 0 : i32
    %c0_i32_1 = arith.constant 0 : i32
    return %arg0, %c0_i32, %c0_i32_0, %arg1 : i32, i32, i32, i32
  }
  func.func @transform_7(%arg0: i32, %arg1: i32) -> (i32, i32, i32, i32) {
    %c0_i32 = arith.constant 0 : i32
    %c0_i32_0 = arith.constant 0 : i32
    %c0_i32_1 = arith.constant 0 : i32
    return %arg0, %c0_i32, %arg1, %c0_i32_0 : i32, i32, i32, i32
  }
}

</mosaic_0001>

<llo_original>
// kernel: tpu_custom_call.1
$region0: #{tpu_custom_call.1}
  #allocation0 [shape = 'u32[]', space=smem, size = 0x4, offset = 0x4, fixed_abs, tag = 'smem constant byte address 0x4 - core index']
  #allocation1 [shape = 'u32[144,128]{1,0:T(1,128)}', space=vmem, size = 0x12000, scoped, tag = 'internal scratch']
  %s0 = inlined_call_operand.hbm [shape: f32[16,128], index: 0, kind: input, shape index: {}]
  %s1 = inlined_call_operand.hbm [shape: f32[8,128], index: 1, kind: input, shape index: {}]
  %s2 = inlined_call_operand.hbm [shape: f32[16,128], index: 2, kind: output, shape index: {}]
  %s3 = sld [smem:[#allocation0]]
  $region49: #{tpu_custom_call.1} parent=0
    _
  %s5 = ssub.s32 1, %s3
  %s6 = scalar_select 0, %s5, %s3
  $region1: #{tpu_custom_call.1} parent=0
    #allocation2 [shape = 'u8[8192]{0}', space=vmem, size = 0x2000, scoped, tag = 'input window, operand 0']
    #allocation3 [shape = 's32[2]{0}', space=sflag, size = 0x8, scoped, tag = 'scoped memory for tpu_custom_call.1']
    #allocation4 [shape = 's32[2]{0}', space=sflag, size = 0x8, scoped, tag = 'scoped memory for tpu_custom_call.1']
    #allocation5 [shape = 'u8[4096]{0}', space=vmem, size = 0x1000, scoped, tag = 'input window, operand 1, single buffered']
    #allocation6 [shape = 's32[1]{0}', space=sflag, size = 0x4, scoped, tag = 'scoped memory for tpu_custom_call.1']
    #allocation7 [shape = 'u8[8192]{0}', space=vmem, size = 0x2000, scoped, tag = 'output window, operand 0']
    %7 = vsyncpa [#allocation3], 0
    %s8 = scalar_lea.sflag [#allocation3], 1
    %9 = vsyncpa %s8, 0
    %10 = vsyncpa [#allocation6], 0
    %11 = vsyncpa [#allocation4], 0
    %s12 = scalar_lea.sflag [#allocation4], 1
    %13 = vsyncpa %s12, 0
    loop: start=0, step=1, limit=4
    $region2: #{tpu_custom_call.1} parent=1 // loop_pre_header
      _
    $region3: #{tpu_custom_call.1} parent=1 // loop_header
      %s15 = sphi 0, %s19
      %p16 = scmp.ge.s32.totalorder %s15, 4
      %s25 = sphi 0, %s27
      %s28 = sphi 0, %s25
      %s29 = sphi 0, %s28
      %s45 = sphi 0, %s29
      %s49 = sphi 0, %s49
      %s51 = sphi 0, %s49
      %s52 = sphi 0, %s51
      %s66 = sphi 0, %s52
      %s72 = sphi 0, %s74
      %s75 = sphi 0, %s72
      %s76 = sphi 0, %s75
      %s92 = sphi 0, %s76
    $region4: #{tpu_custom_call.1} parent=1 // loop_header_branch
      %18 = sbr.rel (%p16) target = $region8
    $region5: #{tpu_custom_call.1} parent=1 // loop_body
      %s20 = ssub.s32 %s15, 1
      %s21 = ssub.s32 %s15, 2
      %s22 = sadd.s32 %s15, 1
      %s23 = ssub.s32 %s15, %s22
      %p24 = scmp.eq.s32.totalorder %s23, 0
      %s26 = sadd.s32 %s25, 1
      %s27 = scalar_select %p24, %s25, %s26
      %p30 = pneg %p24
      %p31 = scmp.eq.s32.totalorder %s15, 1
      %p32 = por %p30, %p31
      %p33 = scmp.ne.s32.totalorder %s25, %s28
      %p34 = scmp.eq.s32.totalorder %s15, 0
      %p35 = por %p33, %p34
      %p36 = scmp.ne.s32.totalorder %s25, %s28
      %p37 = scmp.eq.s32.totalorder %s20, 1
      %p38 = por %p36, %p37
      %p39 = scmp.ne.s32.totalorder %s28, %s29
      %p40 = scmp.eq.s32.totalorder %s20, 0
      %p41 = por %p39, %p40
      %p42 = scmp.ne.s32.totalorder %s28, %s29
      %p43 = scmp.eq.s32.totalorder %s21, 1
      %p44 = por %p42, %p43
      %p46 = scmp.ne.s32.totalorder %s29, %s45
      %p47 = scmp.eq.s32.totalorder %s21, 0
      %p48 = por %p46, %p47
      %s50 = sadd.s32 %s49, 1
      %p53 = scmp.eq.s32.totalorder %s15, 1
      %p54 = scmp.ne.s32.totalorder %s49, %s51
      %p55 = scmp.eq.s32.totalorder %s15, 0
      %p56 = por %p54, %p55
      %p57 = scmp.ne.s32.totalorder %s49, %s51
      %p58 = scmp.eq.s32.totalorder %s20, 1
      %p59 = por %p57, %p58
      %p60 = scmp.ne.s32.totalorder %s51, %s52
      %p61 = scmp.eq.s32.totalorder %s20, 0
      %p62 = por %p60, %p61
      %p63 = scmp.ne.s32.totalorder %s51, %s52
      %p64 = scmp.eq.s32.totalorder %s21, 1
      %p65 = por %p63, %p64
      %p67 = scmp.ne.s32.totalorder %s52, %s66
      %p68 = scmp.eq.s32.totalorder %s21, 0
      %p69 = por %p67, %p68
      %s70 = ssub.s32 %s15, %s22
      %p71 = scmp.eq.s32.totalorder %s70, 0
      %s73 = sadd.s32 %s72, 1
      %s74 = scalar_select %p71, %s72, %s73
      %p77 = pneg %p71
      %p78 = scmp.eq.s32.totalorder %s15, 1
      %p79 = por %p77, %p78
      %p80 = scmp.ne.s32.totalorder %s72, %s75
      %p81 = scmp.eq.s32.totalorder %s15, 0
      %p82 = por %p80, %p81
      %p83 = scmp.ne.s32.totalorder %s72, %s75
      %p84 = scmp.eq.s32.totalorder %s20, 1
      %p85 = por %p83, %p84
      %p86 = scmp.ne.s32.totalorder %s75, %s76
      %p87 = scmp.eq.s32.totalorder %s20, 0
      %p88 = por %p86, %p87
      %p89 = scmp.ne.s32.totalorder %s75, %s76
      %p90 = scmp.eq.s32.totalorder %s21, 1
      %p91 = por %p89, %p90
      %p93 = scmp.ne.s32.totalorder %s76, %s92
      %p94 = scmp.eq.s32.totalorder %s21, 0
      %p95 = por %p93, %p94
      %p96 = scmp.le.s32.totalorder 1, %s15
      %p97 = scmp.lt.s32.totalorder %s15, 3
      %p98 = pnand %p96, %p97
      %p99 = pneg %p98
      // Predicated region
      $region9: #{tpu_custom_call.1} parent=5 // pred_check
        _
      $region10: #{tpu_custom_call.1} parent=5 // pred_check_branch
        %101 = sbr.rel (%p98) target = $region12
      $region11: #{tpu_custom_call.1} parent=5 // pred_region
        %s102 = ssub.s32 %s15, 1
        // Predicated region
        $region13: #{tpu_custom_call.1} parent=11 // pred_check
          %p103 = pneg %p62
        $region14: #{tpu_custom_call.1} parent=11 // pred_check_branch
          %105 = sbr.rel (%p103) target = $region16
        $region15: #{tpu_custom_call.1} parent=11 // pred_region
          %s107 = ssub.s32 128, 128
          %108 = vsyncadd [#allocation6], %s107
          %s110 = sshll.u32 [#allocation5], 4
          %s111 = int_to_ptr.vmem [resolvable:$true] %s110
          %113 = dma.hbm_to_vmem [thread:$0]  %s1, 128, %s111, [#allocation6]
        $region16: #{tpu_custom_call.1} parent=11 // pred_fallthru
          _
      $region12: #{tpu_custom_call.1} parent=5 // pred_fallthru
        _
      %p114 = scmp.lt.s32.totalorder %s15, 2
      // Predicated region
      $region17: #{tpu_custom_call.1} parent=5 // pred_check
        %p115 = pneg %p114
      $region18: #{tpu_custom_call.1} parent=5 // pred_check_branch
        %117 = sbr.rel (%p115) target = $region20
      $region19: #{tpu_custom_call.1} parent=5 // pred_region
        // Predicated region
        $region21: #{tpu_custom_call.1} parent=19 // pred_check
          %p118 = pneg %p35
        $region22: #{tpu_custom_call.1} parent=19 // pred_check_branch
          %120 = sbr.rel (%p118) target = $region24
        $region23: #{tpu_custom_call.1} parent=19 // pred_region
          %s121 = sand.u32 %s25, 1
          %s122 = scalar_lea.sflag [#allocation3], %s121
          %s123 = sand.u32 %s25, 1
          %s124 = smul.addr %s123, 8
          %s125 = scalar_lea.vmem [#allocation2], %s124
          %s127 = ssub.s32 128, 128
          %128 = vsyncadd %s122, %s127
          %s129 = smul.addr %s15, 128
          %s130 = scalar_lea.hbm %s0, %s129
          %s132 = sshll.u32 %s125, 4
          %s133 = int_to_ptr.vmem [resolvable:$true] %s132
          %135 = dma.hbm_to_vmem [thread:$0]  %s130, 128, %s133, %s122
        $region24: #{tpu_custom_call.1} parent=19 // pred_fallthru
          _
      $region20: #{tpu_custom_call.1} parent=5 // pred_fallthru
        _
      %p136 = scmp.le.s32.totalorder 1, %s15
      %p137 = scmp.lt.s32.totalorder %s15, 3
      %p138 = pnand %p136, %p137
      %p139 = pneg %p138
      // Predicated region
      $region25: #{tpu_custom_call.1} parent=5 // pred_check
        _
      $region26: #{tpu_custom_call.1} parent=5 // pred_check_branch
        %141 = sbr.rel (%p138) target = $region28
      $region27: #{tpu_custom_call.1} parent=5 // pred_region
        %s142 = ssub.s32 %s15, 1
        %s143 = sand.u32 %s28, 1
        %s144 = scalar_lea.sflag [#allocation3], %s143
        %s145 = sand.u32 %s28, 1
        %s146 = smul.addr %s145, 8
        %s147 = scalar_lea.vmem [#allocation2], %s146
        // Predicated region
        $region29: #{tpu_custom_call.1} parent=27 // pred_check
          %p148 = pneg %p41
        $region30: #{tpu_custom_call.1} parent=27 // pred_check_branch
          %150 = sbr.rel (%p148) target = $region32
        $region31: #{tpu_custom_call.1} parent=27 // pred_region
          %151 = dma.done %s144, 128
        $region32: #{tpu_custom_call.1} parent=27 // pred_fallthru
          _
        // Predicated region
        $region33: #{tpu_custom_call.1} parent=27 // pred_check
          %p152 = pneg %p62
        $region34: #{tpu_custom_call.1} parent=27 // pred_check_branch
          %154 = sbr.rel (%p152) target = $region36
        $region35: #{tpu_custom_call.1} parent=27 // pred_region
          %155 = dma.done [#allocation6], 128
        $region36: #{tpu_custom_call.1} parent=27 // pred_fallthru
          _
        %s156 = sand.u32 %s28, 1
        %s157 = scalar_lea.sflag [#allocation3], %s156
        %s158 = sand.u32 %s28, 1
        %s159 = smul.addr %s158, 8
        %s160 = scalar_lea.vmem [#allocation2], %s159
        %p161 = pneg %p41
        %p162 = pneg %p38
        %p163 = pneg %p62
        %p164 = pneg %p59
        %p165 = pneg %p88
        %p166 = pneg %p85
        %s167 = sand.u32 %s75, 1
        %s168 = scalar_lea.sflag [#allocation4], %s167
        %s169 = sand.u32 %s75, 1
        %s170 = smul.addr %s169, 8
        %s171 = scalar_lea.vmem [#allocation7], %s170
        %v172 = vld [vmem:[%s147] sm:$0xff]
        %v173 = vld [vmem:[#allocation5] sm:$0xff]
        %v174 = vadd.f32 %v172, %v173
        %175 = vst [vmem:[%s171] sm:$0xff] %v174
        %s176 = sand.u32 %s75, 1
        %s177 = scalar_lea.sflag [#allocation4], %s176
        %s178 = sand.u32 %s75, 1
        %s179 = smul.addr %s178, 8
        %s180 = scalar_lea.vmem [#allocation7], %s179
        // Predicated region
        $region37: #{tpu_custom_call.1} parent=27 // pred_check
          %p181 = pneg %p85
        $region38: #{tpu_custom_call.1} parent=27 // pred_check_branch
          %183 = sbr.rel (%p181) target = $region40
        $region39: #{tpu_custom_call.1} parent=27 // pred_region
          %s185 = ssub.s32 128, 128
          %186 = vsyncadd %s177, %s185
          %s187 = smul.addr %s20, 128
          %s188 = scalar_lea.hbm %s2, %s187
          %s190 = sshll.u32 %s180, 4
          %s191 = int_to_ptr.vmem [resolvable:$true] %s190
          %193 = dma.vmem_to_hbm [thread:$0]  %s191, 128, %s188, %s177
        $region40: #{tpu_custom_call.1} parent=27 // pred_fallthru
          _
      $region28: #{tpu_custom_call.1} parent=5 // pred_fallthru
        _
      %p194 = scmp.le.s32.totalorder 2, %s15
      // Predicated region
      $region41: #{tpu_custom_call.1} parent=5 // pred_check
        %p195 = pneg %p194
      $region42: #{tpu_custom_call.1} parent=5 // pred_check_branch
        %197 = sbr.rel (%p195) target = $region44
      $region43: #{tpu_custom_call.1} parent=5 // pred_region
        %s198 = ssub.s32 %s15, 2
        // Predicated region
        $region45: #{tpu_custom_call.1} parent=43 // pred_check
          %p199 = pneg %p91
        $region46: #{tpu_custom_call.1} parent=43 // pred_check_branch
          %201 = sbr.rel (%p199) target = $region48
        $region47: #{tpu_custom_call.1} parent=43 // pred_region
          %s202 = sand.u32 %s76, 1
          %s203 = scalar_lea.sflag [#allocation4], %s202
          %s204 = sand.u32 %s76, 1
          %s205 = smul.addr %s204, 8
          %s206 = scalar_lea.vmem [#allocation7], %s205
          %207 = dma.done %s203, 128
        $region48: #{tpu_custom_call.1} parent=43 // pred_fallthru
          _
      $region44: #{tpu_custom_call.1} parent=5 // pred_fallthru
        _
    $region6: #{tpu_custom_call.1} parent=1 // loop_footer
      %s19 = sadd.s32 1, %s15
    $region7: #{tpu_custom_call.1} parent=1 // loop_footer_branch
      %14 = sbr.rel target = $region3
    $region8: #{tpu_custom_call.1} parent=1 // loop_exit
      _
    %208 = vsyncpa [#allocation3], 1
    %s209 = scalar_lea.sflag [#allocation3], 1
    %210 = vsyncpa %s209, 1
    %211 = vsyncpa [#allocation6], 1
    %212 = vsyncpa [#allocation4], 1
    %s213 = scalar_lea.sflag [#allocation4], 1
    %214 = vsyncpa %s213, 1

// kernel: tpu_custom_call.1
$region0: #{tpu_custom_call.1}
  #allocation0 [shape = 'u32[]', space=smem, size = 0x4, offset = 0x4, fixed_abs, tag = 'smem constant byte address 0x4 - core index']
  #allocation1 [shape = 'u32[144,128]{1,0:T(1,128)}', space=vmem, size = 0x12000, scoped, tag = 'internal scratch']
  %s0 = inlined_call_operand.hbm [shape: f32[2,8,32], index: 0, kind: input, shape index: {}]
  %s1 = inlined_call_operand.hbm [shape: f32[2,8,32], index: 1, kind: input, shape index: {}]
  %s2 = inlined_call_operand.hbm [shape: bf16[32,32], index: 2, kind: input, shape index: {}]
  %s3 = inlined_call_operand.vmem [shape: f32[1,32], index: 3, kind: input, shape index: {}]
  %s4 = inlined_call_operand.hbm [shape: bf16[32,32], index: 4, kind: input, shape index: {}]
  %s5 = inlined_call_operand.vmem [shape: f32[1,32], index: 5, kind: input, shape index: {}]
  %s6 = inlined_call_operand.hbm [shape: bf16[2,4,8,8], index: 6, kind: output, shape index: {0}]
  %s7 = inlined_call_operand.hbm [shape: bf16[2,4,8,8], index: 7, kind: output, shape index: {1}]
  %8 = xla_tuple %s6, %s7
  %s9 = sld [smem:[#allocation0]]
  $region81: #{tpu_custom_call.1} parent=0
    _
  %s11 = ssub.s32 1, %s9
  %s12 = scalar_select 0, %s11, %s9
  $region1: #{tpu_custom_call.1} parent=0
    #allocation2 [shape = 'u8[8192]{0}', space=vmem, size = 0x2000, scoped, tag = 'input window, operand 0']
    #allocation3 [shape = 's32[2]{0}', space=sflag, size = 0x8, scoped, tag = 'scoped memory for tpu_custom_call.1']
    #allocation4 [shape = 's32[2]{0}', space=sflag, size = 0x8, scoped, tag = 'scoped memory for tpu_custom_call.1']
    #allocation5 [shape = 'u8[8192]{0}', space=vmem, size = 0x2000, scoped, tag = 'input window, operand 1']
    #allocation6 [shape = 's32[2]{0}', space=sflag, size = 0x8, scoped, tag = 'scoped memory for tpu_custom_call.1']
    #allocation7 [shape = 'u8[8192]{0}', space=vmem, size = 0x2000, scoped, tag = 'input window, operand 2, single buffered']
    #allocation8 [shape = 'u8[8192]{0}', space=vmem, size = 0x2000, scoped, tag = 'input window, operand 4, single buffered']
    #allocation9 [shape = 's32[1]{0}', space=sflag, size = 0x4, scoped, tag = 'scoped memory for tpu_custom_call.1']
    #allocation10 [shape = 'u8[16384]{0}', space=vmem, size = 0x4000, scoped, tag = 'output window, operand 0']
    #allocation11 [shape = 'u8[16384]{0}', space=vmem, size = 0x4000, scoped, tag = 'output window, operand 1']
    #allocation12 [shape = 's32[2]{0}', space=sflag, size = 0x8, scoped, tag = 'scoped memory for tpu_custom_call.1']
    %13 = vsyncpa [#allocation3], 0
    %s14 = scalar_lea.sflag [#allocation3], 1
    %15 = vsyncpa %s14, 0
    %16 = vsyncpa [#allocation6], 0
    %s17 = scalar_lea.sflag [#allocation6], 1
    %18 = vsyncpa %s17, 0
    %19 = vsyncpa [#allocation9], 0
    %20 = vsyncpa [#allocation4], 0
    %s21 = scalar_lea.sflag [#allocation4], 1
    %22 = vsyncpa %s21, 0
    %23 = vsyncpa [#allocation12], 0
    %s24 = scalar_lea.sflag [#allocation12], 1
    %25 = vsyncpa %s24, 0
    loop: start=0, step=1, limit=4
    $region2: #{tpu_custom_call.1} parent=1 // loop_pre_header
      _
    $region3: #{tpu_custom_call.1} parent=1 // loop_header
      %s27 = sphi 0, %s31
      %p28 = scmp.ge.s32.totalorder %s27, 4
      %s34 = sphi 0, %s46
      %s35 = sphi 0, %s42
      %s36 = sphi 0, %s34
      %s37 = sphi 0, %s35
      %s38 = sphi 0, %s36
      %s39 = sphi 0, %s37
      %s51 = sphi 0, %s53
      %s54 = sphi 0, %s51
      %s55 = sphi 0, %s54
      %s71 = sphi 0, %s55
      %s79 = sphi 0, %s81
      %s82 = sphi 0, %s79
      %s83 = sphi 0, %s82
      %s99 = sphi 0, %s83
      %s103 = sphi 0, %s103
      %s105 = sphi 0, %s103
      %s106 = sphi 0, %s105
      %s120 = sphi 0, %s106
      %s124 = sphi 0, %s124
      %s126 = sphi 0, %s124
      %s127 = sphi 0, %s126
      %s141 = sphi 0, %s127
      %s145 = sphi 0, %s145
      %s147 = sphi 0, %s145
      %s148 = sphi 0, %s147
      %s162 = sphi 0, %s148
      %s166 = sphi 0, %s166
      %s168 = sphi 0, %s166
      %s169 = sphi 0, %s168
      %s183 = sphi 0, %s169
      %s191 = sphi 0, %s193
      %s194 = sphi 0, %s191
      %s195 = sphi 0, %s194
      %s211 = sphi 0, %s195
      %s219 = sphi 0, %s221
      %s222 = sphi 0, %s219
      %s223 = sphi 0, %s222
      %s239 = sphi 0, %s223
    $region4: #{tpu_custom_call.1} parent=1 // loop_header_branch
      %30 = sbr.rel (%p28) target = $region8
    $region5: #{tpu_custom_call.1} parent=1 // loop_body
      %s32 = ssub.s32 %s27, 1
      %s33 = ssub.s32 %s27, 2
      %s40 = sadd.s32 1, %s35
      %p41 = scmp.ge.s32.totalorder %s40, 1
      %s42 = scalar_select %p41, 0, %s40
      %s43 = sadd.s32 1, %s34
      %s44 = scalar_select %p41, %s43, %s34
      %p45 = scmp.ge.s32.totalorder %s44, 2
      %s46 = scalar_select %p45, 0, %s44
      %s47 = ssub.s32 %s34, %s46
      %s48 = ssub.s32 %s35, %s42
      %s49 = sor.u32 %s47, %s48
      %p50 = scmp.eq.s32.totalorder %s49, 0
      %s52 = sadd.s32 %s51, 1
      %s53 = scalar_select %p50, %s51, %s52
      %p56 = pneg %p50
      %p57 = scmp.eq.s32.totalorder %s27, 1
      %p58 = por %p56, %p57
      %p59 = scmp.ne.s32.totalorder %s51, %s54
      %p60 = scmp.eq.s32.totalorder %s27, 0
      %p61 = por %p59, %p60
      %p62 = scmp.ne.s32.totalorder %s51, %s54
      %p63 = scmp.eq.s32.totalorder %s32, 1
      %p64 = por %p62, %p63
      %p65 = scmp.ne.s32.totalorder %s54, %s55
      %p66 = scmp.eq.s32.totalorder %s32, 0
      %p67 = por %p65, %p66
      %p68 = scmp.ne.s32.totalorder %s54, %s55
      %p69 = scmp.eq.s32.totalorder %s33, 1
      %p70 = por %p68, %p69
      %p72 = scmp.ne.s32.totalorder %s55, %s71
      %p73 = scmp.eq.s32.totalorder %s33, 0
      %p74 = por %p72, %p73
      %s75 = ssub.s32 %s34, %s46
      %s76 = ssub.s32 %s35, %s42
      %s77 = sor.u32 %s75, %s76
      %p78 = scmp.eq.s32.totalorder %s77, 0
      %s80 = sadd.s32 %s79, 1
      %s81 = scalar_select %p78, %s79, %s80
      %p84 = pneg %p78
      %p85 = scmp.eq.s32.totalorder %s27, 1
      %p86 = por %p84, %p85
      %p87 = scmp.ne.s32.totalorder %s79, %s82
      %p88 = scmp.eq.s32.totalorder %s27, 0
      %p89 = por %p87, %p88
      %p90 = scmp.ne.s32.totalorder %s79, %s82
      %p91 = scmp.eq.s32.totalorder %s32, 1
      %p92 = por %p90, %p91
      %p93 = scmp.ne.s32.totalorder %s82, %s83
      %p94 = scmp.eq.s32.totalorder %s32, 0
      %p95 = por %p93, %p94
      %p96 = scmp.ne.s32.totalorder %s82, %s83
      %p97 = scmp.eq.s32.totalorder %s33, 1
      %p98 = por %p96, %p97
      %p100 = scmp.ne.s32.totalorder %s83, %s99
      %p101 = scmp.eq.s32.totalorder %s33, 0
      %p102 = por %p100, %p101
      %s104 = sadd.s32 %s103, 1
      %p107 = scmp.eq.s32.totalorder %s27, 1
      %p108 = scmp.ne.s32.totalorder %s103, %s105
      %p109 = scmp.eq.s32.totalorder %s27, 0
      %p110 = por %p108, %p109
      %p111 = scmp.ne.s32.totalorder %s103, %s105
      %p112 = scmp.eq.s32.totalorder %s32, 1
      %p113 = por %p111, %p112
      %p114 = scmp.ne.s32.totalorder %s105, %s106
      %p115 = scmp.eq.s32.totalorder %s32, 0
      %p116 = por %p114, %p115
      %p117 = scmp.ne.s32.totalorder %s105, %s106
      %p118 = scmp.eq.s32.totalorder %s33, 1
      %p119 = por %p117, %p118
      %p121 = scmp.ne.s32.totalorder %s106, %s120
      %p122 = scmp.eq.s32.totalorder %s33, 0
      %p123 = por %p121, %p122
      %s125 = sadd.s32 %s124, 1
      %p128 = scmp.eq.s32.totalorder %s27, 1
      %p129 = scmp.ne.s32.totalorder %s124, %s126
      %p130 = scmp.eq.s32.totalorder %s27, 0
      %p131 = por %p129, %p130
      %p132 = scmp.ne.s32.totalorder %s124, %s126
      %p133 = scmp.eq.s32.totalorder %s32, 1
      %p134 = por %p132, %p133
      %p135 = scmp.ne.s32.totalorder %s126, %s127
      %p136 = scmp.eq.s32.totalorder %s32, 0
      %p137 = por %p135, %p136
      %p138 = scmp.ne.s32.totalorder %s126, %s127
      %p139 = scmp.eq.s32.totalorder %s33, 1
      %p140 = por %p138, %p139
      %p142 = scmp.ne.s32.totalorder %s127, %s141
      %p143 = scmp.eq.s32.totalorder %s33, 0
      %p144 = por %p142, %p143
      %s146 = sadd.s32 %s145, 1
      %p149 = scmp.eq.s32.totalorder %s27, 1
      %p150 = scmp.ne.s32.totalorder %s145, %s147
      %p151 = scmp.eq.s32.totalorder %s27, 0
      %p152 = por %p150, %p151
      %p153 = scmp.ne.s32.totalorder %s145, %s147
      %p154 = scmp.eq.s32.totalorder %s32, 1
      %p155 = por %p153, %p154
      %p156 = scmp.ne.s32.totalorder %s147, %s148
      %p157 = scmp.eq.s32.totalorder %s32, 0
      %p158 = por %p156, %p157
      %p159 = scmp.ne.s32.totalorder %s147, %s148
      %p160 = scmp.eq.s32.totalorder %s33, 1
      %p161 = por %p159, %p160
      %p163 = scmp.ne.s32.totalorder %s148, %s162
      %p164 = scmp.eq.s32.totalorder %s33, 0
      %p165 = por %p163, %p164
      %s167 = sadd.s32 %s166, 1
      %p170 = scmp.eq.s32.totalorder %s27, 1
      %p171 = scmp.ne.s32.totalorder %s166, %s168
      %p172 = scmp.eq.s32.totalorder %s27, 0
      %p173 = por %p171, %p172
      %p174 = scmp.ne.s32.totalorder %s166, %s168
      %p175 = scmp.eq.s32.totalorder %s32, 1
      %p176 = por %p174, %p175
      %p177 = scmp.ne.s32.totalorder %s168, %s169
      %p178 = scmp.eq.s32.totalorder %s32, 0
      %p179 = por %p177, %p178
      %p180 = scmp.ne.s32.totalorder %s168, %s169
      %p181 = scmp.eq.s32.totalorder %s33, 1
      %p182 = por %p180, %p181
      %p184 = scmp.ne.s32.totalorder %s169, %s183
      %p185 = scmp.eq.s32.totalorder %s33, 0
      %p186 = por %p184, %p185
      %s187 = ssub.s32 %s34, %s46
      %s188 = ssub.s32 %s35, %s42
      %s189 = sor.u32 %s187, %s188
      %p190 = scmp.eq.s32.totalorder %s189, 0
      %s192 = sadd.s32 %s191, 1
      %s193 = scalar_select %p190, %s191, %s192
      %p196 = pneg %p190
      %p197 = scmp.eq.s32.totalorder %s27, 1
      %p198 = por %p196, %p197
      %p199 = scmp.ne.s32.totalorder %s191, %s194
      %p200 = scmp.eq.s32.totalorder %s27, 0
      %p201 = por %p199, %p200
      %p202 = scmp.ne.s32.totalorder %s191, %s194
      %p203 = scmp.eq.s32.totalorder %s32, 1
      %p204 = por %p202, %p203
      %p205 = scmp.ne.s32.totalorder %s194, %s195
      %p206 = scmp.eq.s32.totalorder %s32, 0
      %p207 = por %p205, %p206
      %p208 = scmp.ne.s32.totalorder %s194, %s195
      %p209 = scmp.eq.s32.totalorder %s33, 1
      %p210 = por %p208, %p209
      %p212 = scmp.ne.s32.totalorder %s195, %s211
      %p213 = scmp.eq.s32.totalorder %s33, 0
      %p214 = por %p212, %p213
      %s215 = ssub.s32 %s34, %s46
      %s216 = ssub.s32 %s35, %s42
      %s217 = sor.u32 %s215, %s216
      %p218 = scmp.eq.s32.totalorder %s217, 0
      %s220 = sadd.s32 %s219, 1
      %s221 = scalar_select %p218, %s219, %s220
      %p224 = pneg %p218
      %p225 = scmp.eq.s32.totalorder %s27, 1
      %p226 = por %p224, %p225
      %p227 = scmp.ne.s32.totalorder %s219, %s222
      %p228 = scmp.eq.s32.totalorder %s27, 0
      %p229 = por %p227, %p228
      %p230 = scmp.ne.s32.totalorder %s219, %s222
      %p231 = scmp.eq.s32.totalorder %s32, 1
      %p232 = por %p230, %p231
      %p233 = scmp.ne.s32.totalorder %s222, %s223
      %p234 = scmp.eq.s32.totalorder %s32, 0
      %p235 = por %p233, %p234
      %p236 = scmp.ne.s32.totalorder %s222, %s223
      %p237 = scmp.eq.s32.totalorder %s33, 1
      %p238 = por %p236, %p237
      %p240 = scmp.ne.s32.totalorder %s223, %s239
      %p241 = scmp.eq.s32.totalorder %s33, 0
      %p242 = por %p240, %p241
      %p243 = scmp.le.s32.totalorder 1, %s27
      %p244 = scmp.lt.s32.totalorder %s27, 3
      %p245 = pnand %p243, %p244
      %p246 = pneg %p245
      // Predicated region
      $region9: #{tpu_custom_call.1} parent=5 // pred_check
        _
      $region10: #{tpu_custom_call.1} parent=5 // pred_check_branch
        %248 = sbr.rel (%p245) target = $region12
      $region11: #{tpu_custom_call.1} parent=5 // pred_region
        %s249 = ssub.s32 %s27, 1
        // Predicated region
        $region13: #{tpu_custom_call.1} parent=11 // pred_check
          %p250 = pneg %p116
        $region14: #{tpu_custom_call.1} parent=11 // pred_check_branch
          %252 = sbr.rel (%p250) target = $region16
        $region15: #{tpu_custom_call.1} parent=11 // pred_region
          %s254 = ssub.s32 256, 256
          %255 = vsyncadd [#allocation6], %s254
          %s256 = sshll.u32 [#allocation7], 4
          %s257 = int_to_ptr.vmem [resolvable:$true] %s256
          %262 = dma.hbm_to_vmem [thread:$0]  %s2, 256, %s257, [#allocation6], 64, 64, 4
        $region16: #{tpu_custom_call.1} parent=11 // pred_fallthru
          _
        // Predicated region
        $region17: #{tpu_custom_call.1} parent=11 // pred_check
          %p263 = pneg %p137
        $region18: #{tpu_custom_call.1} parent=11 // pred_check_branch
          %265 = sbr.rel (%p263) target = $region20
        $region19: #{tpu_custom_call.1} parent=11 // pred_region
          _
        $region20: #{tpu_custom_call.1} parent=11 // pred_fallthru
          _
        // Predicated region
        $region21: #{tpu_custom_call.1} parent=11 // pred_check
          %p266 = pneg %p158
        $region22: #{tpu_custom_call.1} parent=11 // pred_check_branch
          %268 = sbr.rel (%p266) target = $region24
        $region23: #{tpu_custom_call.1} parent=11 // pred_region
          %s270 = ssub.s32 256, 256
          %271 = vsyncadd [#allocation9], %s270
          %s272 = sshll.u32 [#allocation8], 4
          %s273 = int_to_ptr.vmem [resolvable:$true] %s272
          %278 = dma.hbm_to_vmem [thread:$0]  %s4, 256, %s273, [#allocation9], 64, 64, 4
        $region24: #{tpu_custom_call.1} parent=11 // pred_fallthru
          _
        // Predicated region
        $region25: #{tpu_custom_call.1} parent=11 // pred_check
          %p279 = pneg %p179
        $region26: #{tpu_custom_call.1} parent=11 // pred_check_branch
          %281 = sbr.rel (%p279) target = $region28
        $region27: #{tpu_custom_call.1} parent=11 // pred_region
          _
        $region28: #{tpu_custom_call.1} parent=11 // pred_fallthru
          _
      $region12: #{tpu_custom_call.1} parent=5 // pred_fallthru
        _
      %p282 = scmp.lt.s32.totalorder %s27, 2
      // Predicated region
      $region29: #{tpu_custom_call.1} parent=5 // pred_check
        %p283 = pneg %p282
      $region30: #{tpu_custom_call.1} parent=5 // pred_check_branch
        %285 = sbr.rel (%p283) target = $region32
      $region31: #{tpu_custom_call.1} parent=5 // pred_region
        // Predicated region
        $region33: #{tpu_custom_call.1} parent=31 // pred_check
          %p286 = pneg %p61
        $region34: #{tpu_custom_call.1} parent=31 // pred_check_branch
          %288 = sbr.rel (%p286) target = $region36
        $region35: #{tpu_custom_call.1} parent=31 // pred_region
          %s289 = sand.u32 %s51, 1
          %s290 = scalar_lea.sflag [#allocation3], %s289
          %s291 = sand.u32 %s51, 1
          %s292 = smul.addr %s291, 8
          %s293 = scalar_lea.vmem [#allocation2], %s292
          %s295 = ssub.s32 128, 128
          %296 = vsyncadd %s290, %s295
          %s297 = sadd.s32 %s35, %s34
          %s298 = smul.addr %s297, 128
          %s299 = scalar_lea.hbm %s0, %s298
          %s301 = sshll.u32 %s293, 4
          %s302 = int_to_ptr.vmem [resolvable:$true] %s301
          %304 = dma.hbm_to_vmem [thread:$0]  %s299, 128, %s302, %s290
        $region36: #{tpu_custom_call.1} parent=31 // pred_fallthru
          _
        // Predicated region
        $region37: #{tpu_custom_call.1} parent=31 // pred_check
          %p305 = pneg %p89
        $region38: #{tpu_custom_call.1} parent=31 // pred_check_branch
          %307 = sbr.rel (%p305) target = $region40
        $region39: #{tpu_custom_call.1} parent=31 // pred_region
          %s308 = sand.u32 %s27, 1
          %s309 = scalar_lea.sflag [#allocation6], %s308
          %s310 = sand.u32 %s79, 1
          %s311 = smul.addr %s310, 8
          %s312 = scalar_lea.vmem [#allocation5], %s311
          %s314 = ssub.s32 128, 128
          %315 = vsyncadd %s309, %s314
          %s316 = sadd.s32 %s35, %s34
          %s317 = smul.addr %s316, 128
          %s318 = scalar_lea.hbm %s1, %s317
          %s320 = sshll.u32 %s312, 4
          %s321 = int_to_ptr.vmem [resolvable:$true] %s320
          %323 = dma.hbm_to_vmem [thread:$0]  %s318, 128, %s321, %s309
        $region40: #{tpu_custom_call.1} parent=31 // pred_fallthru
          _
      $region32: #{tpu_custom_call.1} parent=5 // pred_fallthru
        _
      %p324 = scmp.le.s32.totalorder 1, %s27
      %p325 = scmp.lt.s32.totalorder %s27, 3
      %p326 = pnand %p324, %p325
      %p327 = pneg %p326
      // Predicated region
      $region41: #{tpu_custom_call.1} parent=5 // pred_check
        _
      $region42: #{tpu_custom_call.1} parent=5 // pred_check_branch
        %329 = sbr.rel (%p326) target = $region44
      $region43: #{tpu_custom_call.1} parent=5 // pred_region
        %s330 = ssub.s32 %s27, 1
        %s331 = sand.u32 %s54, 1
        %s332 = scalar_lea.sflag [#allocation3], %s331
        %s333 = sand.u32 %s54, 1
        %s334 = smul.addr %s333, 8
        %s335 = scalar_lea.vmem [#allocation2], %s334
        // Predicated region
        $region45: #{tpu_custom_call.1} parent=43 // pred_check
          %p336 = pneg %p67
        $region46: #{tpu_custom_call.1} parent=43 // pred_check_branch
          %338 = sbr.rel (%p336) target = $region48
        $region47: #{tpu_custom_call.1} parent=43 // pred_region
          %339 = dma.done %s332, 128
        $region48: #{tpu_custom_call.1} parent=43 // pred_fallthru
          _
        %s340 = sand.u32 %s32, 1
        %s341 = scalar_lea.sflag [#allocation6], %s340
        %s342 = sand.u32 %s82, 1
        %s343 = smul.addr %s342, 8
        %s344 = scalar_lea.vmem [#allocation5], %s343
        // Predicated region
        $region49: #{tpu_custom_call.1} parent=43 // pred_check
          %p345 = pneg %p95
        $region50: #{tpu_custom_call.1} parent=43 // pred_check_branch
          %347 = sbr.rel (%p345) target = $region52
        $region51: #{tpu_custom_call.1} parent=43 // pred_region
          %348 = dma.done %s341, 128
        $region52: #{tpu_custom_call.1} parent=43 // pred_fallthru
          _
        // Predicated region
        $region53: #{tpu_custom_call.1} parent=43 // pred_check
          %p349 = pneg %p116
        $region54: #{tpu_custom_call.1} parent=43 // pred_check_branch
          %351 = sbr.rel (%p349) target = $region56
        $region55: #{tpu_custom_call.1} parent=43 // pred_region
          %352 = dma.done [#allocation6], 256
        $region56: #{tpu_custom_call.1} parent=43 // pred_fallthru
          _
        // Predicated region
        $region57: #{tpu_custom_call.1} parent=43 // pred_check
          %p353 = pneg %p158
        $region58: #{tpu_custom_call.1} parent=43 // pred_check_branch
          %355 = sbr.rel (%p353) target = $region60
        $region59: #{tpu_custom_call.1} parent=43 // pred_region
          %356 = dma.done [#allocation9], 256
        $region60: #{tpu_custom_call.1} parent=43 // pred_fallthru
          _
        %s357 = sand.u32 %s54, 1
        %s358 = scalar_lea.sflag [#allocation3], %s357
        %s359 = sand.u32 %s54, 1
        %s360 = smul.addr %s359, 8
        %s361 = scalar_lea.vmem [#allocation2], %s360
        %p362 = pneg %p67
        %p363 = pneg %p64
        %s364 = sand.u32 %s32, 1
        %s365 = scalar_lea.sflag [#allocation6], %s364
        %s366 = sand.u32 %s82, 1
        %s367 = smul.addr %s366, 8
        %s368 = scalar_lea.vmem [#allocation5], %s367
        %p369 = pneg %p95
        %p370 = pneg %p92
        %p371 = pneg %p116
        %p372 = pneg %p113
        %p373 = pneg %p137
        %p374 = pneg %p134
        %p375 = pneg %p158
        %p376 = pneg %p155
        %p377 = pneg %p179
        %p378 = pneg %p176
        %p379 = pneg %p207
        %p380 = pneg %p204
        %s381 = sand.u32 %s194, 1
        %s382 = scalar_lea.sflag [#allocation4], %s381
        %s383 = sand.u32 %s194, 1
        %s384 = smul.addr %s383, 16
        %s385 = scalar_lea.vmem [#allocation10], %s384
        %p386 = pneg %p235
        %p387 = pneg %p232
        %s388 = sand.u32 %s222, 1
        %s389 = scalar_lea.sflag [#allocation12], %s388
        %s390 = sand.u32 %s222, 1
        %s391 = smul.addr %s390, 16
        %s392 = scalar_lea.vmem [#allocation11], %s391
        %v394 = vld [vmem:[%s335] sm:$0xff]
        %v395 = vpack.c.bf16 %v394, %v394
        %v396 = vld [vmem:[%s344] sm:$0xff]
        %v397 = vpack.c.bf16 %v396, %v396
        %v398 = vld [vmem:[#allocation7] sm:$0xf]
        %v399 = vld [vmem:[#allocation7 + $0x4] sm:$0xf]
        %v400 = vld [vmem:[#allocation7 + $0x8] sm:$0xf]
        %v401 = vld [vmem:[#allocation7 + $0xc] sm:$0xf]
        %v402 = vld [vmem:[%s3] sm:$0x1]
        %v404 = vlaneseq
        %v405 = vshrl.u32 %v404, 7
        %v406 = vsub.s32 0, %v405
        %v407 = vrot.slane %v402, %v406
        %v413 = vunpack.c.l.b16 %v398
        %v414 = vunpack.c.l.b16 %v399
        %v415 = vunpack.c.l.b16 %v400
        %v416 = vunpack.c.l.b16 %v401
        %v417 = vpack.c.b16 %v414, %v413
        %v418 = vpack.c.b16 %v416, %v415
        %vm421 = vcmask 261120
        %v423 = vsel %vm421, %v395, 0
        %425 = vmatprep.subr.bf16.mxu0 0
        %426 = vmatpush1.bf16.msra.mxu0 %v417
        %427 = vmatprep.subr.bf16.mxu0 0
        %428 = vmatpush1.bf16.msra.mxu0 %v418
        %429 = vmatprep.subr.bf16.mxu0 0
        %430 = vmatpush1.bf16.msra.mxu0 0
        %431 = vmatprep.subr.bf16.mxu0 0
        %432 = vmatpush1.bf16.msra.mxu0 0
        %433 = vmatprep.subr.bf16.mxu0 0
        %434 = vmatpush1.bf16.msra.mxu0 0
        %435 = vmatprep.subr.bf16.mxu0 0
        %436 = vmatpush1.bf16.msra.mxu0 0
        %437 = vmatprep.subr.bf16.mxu0 0
        %438 = vmatpush1.bf16.msra.mxu0 0
        %439 = vmatprep.subr.bf16.mxu0 0
        %440 = vmatpush1.bf16.msra.mxu0 0
        %441 = vmatprep.subr.bf16.mxu0 0
        %442 = vmatpush1.bf16.msra.mxu0 0
        %443 = vmatprep.subr.bf16.mxu0 0
        %444 = vmatpush1.bf16.msra.mxu0 0
        %445 = vmatprep.subr.bf16.mxu0 0
        %446 = vmatpush1.bf16.msra.mxu0 0
        %447 = vmatprep.subr.bf16.mxu0 0
        %448 = vmatpush1.bf16.msra.mxu0 0
        %449 = vmatprep.subr.bf16.mxu0 0
        %450 = vmatpush1.bf16.msra.mxu0 0
        %451 = vmatprep.subr.bf16.mxu0 0
        %452 = vmatpush1.bf16.msra.mxu0 0
        %453 = vmatprep.subr.bf16.mxu0 0
        %454 = vmatpush1.bf16.msra.mxu0 0
        %455 = vmatprep.subr.bf16.mxu0 0
        %456 = vmatpush1.bf16.msra.mxu0 0
        %457 = vmatprep.mubr.bf16.mxu0 0
        %458 = vmatmul.mubr.bf16.gmra.mrb[0].mxu0 %v423
        %v459 = vpop.f32.mrb[0].mxu0
        %v460 = vadd.f32 %v407, %v459
        %v461 = vpop.f32.mrb[0].mxu0
        %v462 = vpop.f32.mrb[0].mxu0
        %v463 = vpop.f32.mrb[0].mxu0
        %464 = vdwg.mxu0
        %v465 = vld [vmem:[#allocation8] sm:$0xf]
        %v466 = vld [vmem:[#allocation8 + $0x4] sm:$0xf]
        %v467 = vld [vmem:[#allocation8 + $0x8] sm:$0xf]
        %v468 = vld [vmem:[#allocation8 + $0xc] sm:$0xf]
        %v469 = vld [vmem:[%s5] sm:$0x1]
        %v471 = vlaneseq
        %v472 = vshrl.u32 %v471, 7
        %v473 = vsub.s32 0, %v472
        %v474 = vrot.slane %v469, %v473
        %v480 = vunpack.c.l.b16 %v465
        %v481 = vunpack.c.l.b16 %v466
        %v482 = vunpack.c.l.b16 %v467
        %v483 = vunpack.c.l.b16 %v468
        %v484 = vpack.c.b16 %v481, %v480
        %v485 = vpack.c.b16 %v483, %v482
        %v489 = vsel %vm421, %v397, 0
        %491 = vmatprep.subr.bf16.mxu0 0
        %492 = vmatpush1.bf16.msra.mxu0 %v484
        %493 = vmatprep.subr.bf16.mxu0 0
        %494 = vmatpush1.bf16.msra.mxu0 %v485
        %495 = vmatprep.subr.bf16.mxu0 0
        %496 = vmatpush1.bf16.msra.mxu0 0
        %497 = vmatprep.subr.bf16.mxu0 0
        %498 = vmatpush1.bf16.msra.mxu0 0
        %499 = vmatprep.subr.bf16.mxu0 0
        %500 = vmatpush1.bf16.msra.mxu0 0
        %501 = vmatprep.subr.bf16.mxu0 0
        %502 = vmatpush1.bf16.msra.mxu0 0
        %503 = vmatprep.subr.bf16.mxu0 0
        %504 = vmatpush1.bf16.msra.mxu0 0
        %505 = vmatprep.subr.bf16.mxu0 0
        %506 = vmatpush1.bf16.msra.mxu0 0
        %507 = vmatprep.subr.bf16.mxu0 0
        %508 = vmatpush1.bf16.msra.mxu0 0
        %509 = vmatprep.subr.bf16.mxu0 0
        %510 = vmatpush1.bf16.msra.mxu0 0
        %511 = vmatprep.subr.bf16.mxu0 0
        %512 = vmatpush1.bf16.msra.mxu0 0
        %513 = vmatprep.subr.bf16.mxu0 0
        %514 = vmatpush1.bf16.msra.mxu0 0
        %515 = vmatprep.subr.bf16.mxu0 0
        %516 = vmatpush1.bf16.msra.mxu0 0
        %517 = vmatprep.subr.bf16.mxu0 0
        %518 = vmatpush1.bf16.msra.mxu0 0
        %519 = vmatprep.subr.bf16.mxu0 0
        %520 = vmatpush1.bf16.msra.mxu0 0
        %521 = vmatprep.subr.bf16.mxu0 0
        %522 = vmatpush1.bf16.msra.mxu0 0
        %523 = vmatprep.mubr.bf16.mxu0 0
        %524 = vmatmul.mubr.bf16.gmra.mrb[0].mxu0 %v489
        %v525 = vpop.f32.mrb[0].mxu0
        %v526 = vadd.f32 %v474, %v525
        %v527 = vpop.f32.mrb[0].mxu0
        %v528 = vpop.f32.mrb[0].mxu0
        %v529 = vpop.f32.mrb[0].mxu0
        %530 = vdwg.mxu0
        %532 = vrot.lane.b32.xlu0 %v460, 120
        %v533 = vpop.permute.xlu0 %532
        %535 = vrot.lane.b32.xlu0 %v460, 112
        %v536 = vpop.permute.xlu0 %535
        %538 = vrot.lane.b32.xlu0 %v460, 104
        %v539 = vpop.permute.xlu0 %538
        %v541 = vcombine.low %v460, %v536
        %v542 = vcombine.high %v460, %v536
        %v544 = vunpack.c.l.s4 1983009808
        %v545 = vunpack.c.0.s8 %v544
        %v546 = vlaneseq
        %v547 = vshrl.u32 %v546, 7
        %v548 = vsub.s32 %v545, %v547
        %v549 = vrot.slane %v541, %v548
        %v551 = vunpack.c.l.s4 1983009808
        %v552 = vunpack.c.0.s8 %v551
        %v553 = vlaneseq
        %v554 = vshrl.u32 %v553, 7
        %v555 = vsub.s32 %v552, %v554
        %v556 = vrot.slane %v542, %v555
        %v557 = vcombine.low %v533, %v539
        %v558 = vcombine.high %v533, %v539
        %v560 = vunpack.c.l.s4 1983009808
        %v561 = vunpack.c.0.s8 %v560
        %v562 = vlaneseq
        %v563 = vshrl.u32 %v562, 7
        %v564 = vsub.s32 %v561, %v563
        %v565 = vrot.slane %v557, %v564
        %v567 = vunpack.c.l.s4 1983009808
        %v568 = vunpack.c.0.s8 %v567
        %v569 = vlaneseq
        %v570 = vshrl.u32 %v569, 7
        %v571 = vsub.s32 %v568, %v570
        %v572 = vrot.slane %v558, %v571
        %v573 = vcombine.low %v549, %v565
        %v574 = vcombine.high %v549, %v565
        %v576 = vunpack.c.l.s4 1934713408
        %v577 = vunpack.c.0.s8 %v576
        %v578 = vlaneseq
        %v579 = vshrl.u32 %v578, 7
        %v580 = vsub.s32 %v577, %v579
        %v581 = vrot.slane %v573, %v580
        %v583 = vunpack.c.l.s4 1934713408
        %v584 = vunpack.c.0.s8 %v583
        %v585 = vlaneseq
        %v586 = vshrl.u32 %v585, 7
        %v587 = vsub.s32 %v584, %v586
        %v588 = vrot.slane %v574, %v587
        %v589 = vcombine.low %v556, %v572
        %v590 = vcombine.high %v556, %v572
        %v592 = vunpack.c.l.s4 1934713408
        %v593 = vunpack.c.0.s8 %v592
        %v594 = vlaneseq
        %v595 = vshrl.u32 %v594, 7
        %v596 = vsub.s32 %v593, %v595
        %v597 = vrot.slane %v589, %v596
        %v599 = vunpack.c.l.s4 1934713408
        %v600 = vunpack.c.0.s8 %v599
        %v601 = vlaneseq
        %v602 = vshrl.u32 %v601, 7
        %v603 = vsub.s32 %v600, %v602
        %v604 = vrot.slane %v590, %v603
        %v605 = vcombine.high %v581, 0.0
        %v606 = vcombine.high %v588, 0.0
        %v607 = vcombine.high %v597, 0.0
        %v608 = vcombine.high %v604, 0.0
        %609 = vxpose.xlu0.b32.start [1/16] %v581, 128
        %610 = vxpose.xlu0.b32.cont [2/16] 0.0, 128
        %611 = vxpose.xlu0.b32.cont [3/16] 0.0, 128
        %612 = vxpose.xlu0.b32.cont [4/16] 0.0, 128
        %613 = vxpose.xlu0.b32.cont [5/16] 0.0, 128
        %614 = vxpose.xlu0.b32.cont [6/16] 0.0, 128
        %615 = vxpose.xlu0.b32.cont [7/16] 0.0, 128
        %616 = vxpose.xlu0.b32.cont [8/16] 0.0, 128
        %617 = vxpose.xlu0.b32.cont [9/16] 0.0, 128
        %618 = vxpose.xlu0.b32.cont [10/16] 0.0, 128
        %619 = vxpose.xlu0.b32.cont [11/16] 0.0, 128
        %620 = vxpose.xlu0.b32.cont [12/16] 0.0, 128
        %621 = vxpose.xlu0.b32.cont [13/16] 0.0, 128
        %622 = vxpose.xlu0.b32.cont [14/16] 0.0, 128
        %623 = vxpose.xlu0.b32.cont [15/16] 0.0, 128
        %624 = vxpose.xlu0.b32.end [16/16] 0.0, 128
        %v625 = vpop.trf.xlu0
        %v626 = vpop.trf.xlu0
        %v627 = vpop.trf.xlu0
        %v628 = vpop.trf.xlu0
        %v629 = vpop.trf.xlu0
        %v630 = vpop.trf.xlu0
        %v631 = vpop.trf.xlu0
        %v632 = vpop.trf.xlu0
        %v633 = vpop.trf.xlu0
        %v634 = vpop.trf.xlu0
        %v635 = vpop.trf.xlu0
        %v636 = vpop.trf.xlu0
        %v637 = vpop.trf.xlu0
        %v638 = vpop.trf.xlu0
        %v639 = vpop.trf.xlu0
        %v640 = vpop.trf.xlu0
        %641 = vxpose.xlu0.b32.start [1/16] %v605, 128
        %642 = vxpose.xlu0.b32.cont [2/16] 0.0, 128
        %643 = vxpose.xlu0.b32.cont [3/16] 0.0, 128
        %644 = vxpose.xlu0.b32.cont [4/16] 0.0, 128
        %645 = vxpose.xlu0.b32.cont [5/16] 0.0, 128
        %646 = vxpose.xlu0.b32.cont [6/16] 0.0, 128
        %647 = vxpose.xlu0.b32.cont [7/16] 0.0, 128
        %648 = vxpose.xlu0.b32.cont [8/16] 0.0, 128
        %649 = vxpose.xlu0.b32.cont [9/16] 0.0, 128
        %650 = vxpose.xlu0.b32.cont [10/16] 0.0, 128
        %651 = vxpose.xlu0.b32.cont [11/16] 0.0, 128
        %652 = vxpose.xlu0.b32.cont [12/16] 0.0, 128
        %653 = vxpose.xlu0.b32.cont [13/16] 0.0, 128
        %654 = vxpose.xlu0.b32.cont [14/16] 0.0, 128
        %655 = vxpose.xlu0.b32.cont [15/16] 0.0, 128
        %656 = vxpose.xlu0.b32.end [16/16] 0.0, 128
        %v657 = vpop.trf.xlu0
        %v658 = vpop.trf.xlu0
        %v659 = vpop.trf.xlu0
        %v660 = vpop.trf.xlu0
        %v661 = vpop.trf.xlu0
        %v662 = vpop.trf.xlu0
        %v663 = vpop.trf.xlu0
        %v664 = vpop.trf.xlu0
        %v665 = vpop.trf.xlu0
        %v666 = vpop.trf.xlu0
        %v667 = vpop.trf.xlu0
        %v668 = vpop.trf.xlu0
        %v669 = vpop.trf.xlu0
        %v670 = vpop.trf.xlu0
        %v671 = vpop.trf.xlu0
        %v672 = vpop.trf.xlu0
        %673 = vxpose.xlu0.b32.start [1/16] %v588, 128
        %674 = vxpose.xlu0.b32.cont [2/16] 0.0, 128
        %675 = vxpose.xlu0.b32.cont [3/16] 0.0, 128
        %676 = vxpose.xlu0.b32.cont [4/16] 0.0, 128
        %677 = vxpose.xlu0.b32.cont [5/16] 0.0, 128
        %678 = vxpose.xlu0.b32.cont [6/16] 0.0, 128
        %679 = vxpose.xlu0.b32.cont [7/16] 0.0, 128
        %680 = vxpose.xlu0.b32.cont [8/16] 0.0, 128
        %681 = vxpose.xlu0.b32.cont [9/16] 0.0, 128
        %682 = vxpose.xlu0.b32.cont [10/16] 0.0, 128
        %683 = vxpose.xlu0.b32.cont [11/16] 0.0, 128
        %684 = vxpose.xlu0.b32.cont [12/16] 0.0, 128
        %685 = vxpose.xlu0.b32.cont [13/16] 0.0, 128
        %686 = vxpose.xlu0.b32.cont [14/16] 0.0, 128
        %687 = vxpose.xlu0.b32.cont [15/16] 0.0, 128
        %688 = vxpose.xlu0.b32.end [16/16] 0.0, 128
        %v689 = vpop.trf.xlu0
        %v690 = vpop.trf.xlu0
        %v691 = vpop.trf.xlu0
        %v692 = vpop.trf.xlu0
        %v693 = vpop.trf.xlu0
        %v694 = vpop.trf.xlu0
        %v695 = vpop.trf.xlu0
        %v696 = vpop.trf.xlu0
        %v697 = vpop.trf.xlu0
        %v698 = vpop.trf.xlu0
        %v699 = vpop.trf.xlu0
        %v700 = vpop.trf.xlu0
        %v701 = vpop.trf.xlu0
        %v702 = vpop.trf.xlu0
        %v703 = vpop.trf.xlu0
        %v704 = vpop.trf.xlu0
        %705 = vxpose.xlu0.b32.start [1/16] %v606, 128
        %706 = vxpose.xlu0.b32.cont [2/16] 0.0, 128
        %707 = vxpose.xlu0.b32.cont [3/16] 0.0, 128
        %708 = vxpose.xlu0.b32.cont [4/16] 0.0, 128
        %709 = vxpose.xlu0.b32.cont [5/16] 0.0, 128
        %710 = vxpose.xlu0.b32.cont [6/16] 0.0, 128
        %711 = vxpose.xlu0.b32.cont [7/16] 0.0, 128
        %712 = vxpose.xlu0.b32.cont [8/16] 0.0, 128
        %713 = vxpose.xlu0.b32.cont [9/16] 0.0, 128
        %714 = vxpose.xlu0.b32.cont [10/16] 0.0, 128
        %715 = vxpose.xlu0.b32.cont [11/16] 0.0, 128
        %716 = vxpose.xlu0.b32.cont [12/16] 0.0, 128
        %717 = vxpose.xlu0.b32.cont [13/16] 0.0, 128
        %718 = vxpose.xlu0.b32.cont [14/16] 0.0, 128
        %719 = vxpose.xlu0.b32.cont [15/16] 0.0, 128
        %720 = vxpose.xlu0.b32.end [16/16] 0.0, 128
        %v721 = vpop.trf.xlu0
        %v722 = vpop.trf.xlu0
        %v723 = vpop.trf.xlu0
        %v724 = vpop.trf.xlu0
        %v725 = vpop.trf.xlu0
        %v726 = vpop.trf.xlu0
        %v727 = vpop.trf.xlu0
        %v728 = vpop.trf.xlu0
        %v729 = vpop.trf.xlu0
        %v730 = vpop.trf.xlu0
        %v731 = vpop.trf.xlu0
        %v732 = vpop.trf.xlu0
        %v733 = vpop.trf.xlu0
        %v734 = vpop.trf.xlu0
        %v735 = vpop.trf.xlu0
        %v736 = vpop.trf.xlu0
        %737 = vxpose.xlu0.b32.start [1/16] %v597, 128
        %738 = vxpose.xlu0.b32.cont [2/16] 0.0, 128
        %739 = vxpose.xlu0.b32.cont [3/16] 0.0, 128
        %740 = vxpose.xlu0.b32.cont [4/16] 0.0, 128
        %741 = vxpose.xlu0.b32.cont [5/16] 0.0, 128
        %742 = vxpose.xlu0.b32.cont [6/16] 0.0, 128
        %743 = vxpose.xlu0.b32.cont [7/16] 0.0, 128
        %744 = vxpose.xlu0.b32.cont [8/16] 0.0, 128
        %745 = vxpose.xlu0.b32.cont [9/16] 0.0, 128
        %746 = vxpose.xlu0.b32.cont [10/16] 0.0, 128
        %747 = vxpose.xlu0.b32.cont [11/16] 0.0, 128
        %748 = vxpose.xlu0.b32.cont [12/16] 0.0, 128
        %749 = vxpose.xlu0.b32.cont [13/16] 0.0, 128
        %750 = vxpose.xlu0.b32.cont [14/16] 0.0, 128
        %751 = vxpose.xlu0.b32.cont [15/16] 0.0, 128
        %752 = vxpose.xlu0.b32.end [16/16] 0.0, 128
        %v753 = vpop.trf.xlu0
        %v754 = vpop.trf.xlu0
        %v755 = vpop.trf.xlu0
        %v756 = vpop.trf.xlu0
        %v757 = vpop.trf.xlu0
        %v758 = vpop.trf.xlu0
        %v759 = vpop.trf.xlu0
        %v760 = vpop.trf.xlu0
        %v761 = vpop.trf.xlu0
        %v762 = vpop.trf.xlu0
        %v763 = vpop.trf.xlu0
        %v764 = vpop.trf.xlu0
        %v765 = vpop.trf.xlu0
        %v766 = vpop.trf.xlu0
        %v767 = vpop.trf.xlu0
        %v768 = vpop.trf.xlu0
        %769 = vxpose.xlu0.b32.start [1/16] %v607, 128
        %770 = vxpose.xlu0.b32.cont [2/16] 0.0, 128
        %771 = vxpose.xlu0.b32.cont [3/16] 0.0, 128
        %772 = vxpose.xlu0.b32.cont [4/16] 0.0, 128
        %773 = vxpose.xlu0.b32.cont [5/16] 0.0, 128
        %774 = vxpose.xlu0.b32.cont [6/16] 0.0, 128
        %775 = vxpose.xlu0.b32.cont [7/16] 0.0, 128
        %776 = vxpose.xlu0.b32.cont [8/16] 0.0, 128
        %777 = vxpose.xlu0.b32.cont [9/16] 0.0, 128
        %778 = vxpose.xlu0.b32.cont [10/16] 0.0, 128
        %779 = vxpose.xlu0.b32.cont [11/16] 0.0, 128
        %780 = vxpose.xlu0.b32.cont [12/16] 0.0, 128
        %781 = vxpose.xlu0.b32.cont [13/16] 0.0, 128
        %782 = vxpose.xlu0.b32.cont [14/16] 0.0, 128
        %783 = vxpose.xlu0.b32.cont [15/16] 0.0, 128
        %784 = vxpose.xlu0.b32.end [16/16] 0.0, 128
        %v785 = vpop.trf.xlu0
        %v786 = vpop.trf.xlu0
        %v787 = vpop.trf.xlu0
        %v788 = vpop.trf.xlu0
        %v789 = vpop.trf.xlu0
        %v790 = vpop.trf.xlu0
        %v791 = vpop.trf.xlu0
        %v792 = vpop.trf.xlu0
        %v793 = vpop.trf.xlu0
        %v794 = vpop.trf.xlu0
        %v795 = vpop.trf.xlu0
        %v796 = vpop.trf.xlu0
        %v797 = vpop.trf.xlu0
        %v798 = vpop.trf.xlu0
        %v799 = vpop.trf.xlu0
        %v800 = vpop.trf.xlu0
        %801 = vxpose.xlu0.b32.start [1/16] %v604, 128
        %802 = vxpose.xlu0.b32.cont [2/16] 0.0, 128
        %803 = vxpose.xlu0.b32.cont [3/16] 0.0, 128
        %804 = vxpose.xlu0.b32.cont [4/16] 0.0, 128
        %805 = vxpose.xlu0.b32.cont [5/16] 0.0, 128
        %806 = vxpose.xlu0.b32.cont [6/16] 0.0, 128
        %807 = vxpose.xlu0.b32.cont [7/16] 0.0, 128
        %808 = vxpose.xlu0.b32.cont [8/16] 0.0, 128
        %809 = vxpose.xlu0.b32.cont [9/16] 0.0, 128
        %810 = vxpose.xlu0.b32.cont [10/16] 0.0, 128
        %811 = vxpose.xlu0.b32.cont [11/16] 0.0, 128
        %812 = vxpose.xlu0.b32.cont [12/16] 0.0, 128
        %813 = vxpose.xlu0.b32.cont [13/16] 0.0, 128
        %814 = vxpose.xlu0.b32.cont [14/16] 0.0, 128
        %815 = vxpose.xlu0.b32.cont [15/16] 0.0, 128
        %816 = vxpose.xlu0.b32.end [16/16] 0.0, 128
        %v817 = vpop.trf.xlu0
        %v818 = vpop.trf.xlu0
        %v819 = vpop.trf.xlu0
        %v820 = vpop.trf.xlu0
        %v821 = vpop.trf.xlu0
        %v822 = vpop.trf.xlu0
        %v823 = vpop.trf.xlu0
        %v824 = vpop.trf.xlu0
        %v825 = vpop.trf.xlu0
        %v826 = vpop.trf.xlu0
        %v827 = vpop.trf.xlu0
        %v828 = vpop.trf.xlu0
        %v829 = vpop.trf.xlu0
        %v830 = vpop.trf.xlu0
        %v831 = vpop.trf.xlu0
        %v832 = vpop.trf.xlu0
        %833 = vxpose.xlu0.b32.start [1/16] %v608, 128
        %834 = vxpose.xlu0.b32.cont [2/16] 0.0, 128
        %835 = vxpose.xlu0.b32.cont [3/16] 0.0, 128
        %836 = vxpose.xlu0.b32.cont [4/16] 0.0, 128
        %837 = vxpose.xlu0.b32.cont [5/16] 0.0, 128
        %838 = vxpose.xlu0.b32.cont [6/16] 0.0, 128
        %839 = vxpose.xlu0.b32.cont [7/16] 0.0, 128
        %840 = vxpose.xlu0.b32.cont [8/16] 0.0, 128
        %841 = vxpose.xlu0.b32.cont [9/16] 0.0, 128
        %842 = vxpose.xlu0.b32.cont [10/16] 0.0, 128
        %843 = vxpose.xlu0.b32.cont [11/16] 0.0, 128
        %844 = vxpose.xlu0.b32.cont [12/16] 0.0, 128
        %845 = vxpose.xlu0.b32.cont [13/16] 0.0, 128
        %846 = vxpose.xlu0.b32.cont [14/16] 0.0, 128
        %847 = vxpose.xlu0.b32.cont [15/16] 0.0, 128
        %848 = vxpose.xlu0.b32.end [16/16] 0.0, 128
        %v849 = vpop.trf.xlu0
        %v850 = vpop.trf.xlu0
        %v851 = vpop.trf.xlu0
        %v852 = vpop.trf.xlu0
        %v853 = vpop.trf.xlu0
        %v854 = vpop.trf.xlu0
        %v855 = vpop.trf.xlu0
        %v856 = vpop.trf.xlu0
        %v857 = vpop.trf.xlu0
        %v858 = vpop.trf.xlu0
        %v859 = vpop.trf.xlu0
        %v860 = vpop.trf.xlu0
        %v861 = vpop.trf.xlu0
        %v862 = vpop.trf.xlu0
        %v863 = vpop.trf.xlu0
        %v864 = vpop.trf.xlu0
        %v865 = vcombine.low %v625, %v689
        %v866 = vcombine.high %v625, %v689
        %v868 = vunpack.c.l.s4 1983009808
        %v869 = vunpack.c.0.s8 %v868
        %v870 = vlaneseq
        %v871 = vshrl.u32 %v870, 7
        %v872 = vsub.s32 %v869, %v871
        %v873 = vrot.slane %v865, %v872
        %v875 = vunpack.c.l.s4 1983009808
        %v876 = vunpack.c.0.s8 %v875
        %v877 = vlaneseq
        %v878 = vshrl.u32 %v877, 7
        %v879 = vsub.s32 %v876, %v878
        %v880 = vrot.slane %v866, %v879
        %v881 = vcombine.low %v657, %v721
        %v882 = vcombine.high %v657, %v721
        %v884 = vunpack.c.l.s4 1983009808
        %v885 = vunpack.c.0.s8 %v884
        %v886 = vlaneseq
        %v887 = vshrl.u32 %v886, 7
        %v888 = vsub.s32 %v885, %v887
        %v889 = vrot.slane %v881, %v888
        %v891 = vunpack.c.l.s4 1983009808
        %v892 = vunpack.c.0.s8 %v891
        %v893 = vlaneseq
        %v894 = vshrl.u32 %v893, 7
        %v895 = vsub.s32 %v892, %v894
        %v896 = vrot.slane %v882, %v895
        %v897 = vcombine.low %v753, %v817
        %v898 = vcombine.high %v753, %v817
        %v900 = vunpack.c.l.s4 1983009808
        %v901 = vunpack.c.0.s8 %v900
        %v902 = vlaneseq
        %v903 = vshrl.u32 %v902, 7
        %v904 = vsub.s32 %v901, %v903
        %v905 = vrot.slane %v897, %v904
        %v907 = vunpack.c.l.s4 1983009808
        %v908 = vunpack.c.0.s8 %v907
        %v909 = vlaneseq
        %v910 = vshrl.u32 %v909, 7
        %v911 = vsub.s32 %v908, %v910
        %v912 = vrot.slane %v898, %v911
        %v913 = vcombine.low %v785, %v849
        %v914 = vcombine.high %v785, %v849
        %v916 = vunpack.c.l.s4 1983009808
        %v917 = vunpack.c.0.s8 %v916
        %v918 = vlaneseq
        %v919 = vshrl.u32 %v918, 7
        %v920 = vsub.s32 %v917, %v919
        %v921 = vrot.slane %v913, %v920
        %v923 = vunpack.c.l.s4 1983009808
        %v924 = vunpack.c.0.s8 %v923
        %v925 = vlaneseq
        %v926 = vshrl.u32 %v925, 7
        %v927 = vsub.s32 %v924, %v926
        %v928 = vrot.slane %v914, %v927
        %v929 = vcombine.low %v873, %v889
        %v930 = vcombine.high %v873, %v889
        %v932 = vunpack.c.l.s4 1934713408
        %v933 = vunpack.c.0.s8 %v932
        %v934 = vlaneseq
        %v935 = vshrl.u32 %v934, 7
        %v936 = vsub.s32 %v933, %v935
        %v937 = vrot.slane %v929, %v936
        %v939 = vunpack.c.l.s4 1934713408
        %v940 = vunpack.c.0.s8 %v939
        %v941 = vlaneseq
        %v942 = vshrl.u32 %v941, 7
        %v943 = vsub.s32 %v940, %v942
        %v944 = vrot.slane %v930, %v943
        %v945 = vcombine.low %v880, %v896
        %v946 = vcombine.high %v880, %v896
        %v948 = vunpack.c.l.s4 1934713408
        %v949 = vunpack.c.0.s8 %v948
        %v950 = vlaneseq
        %v951 = vshrl.u32 %v950, 7
        %v952 = vsub.s32 %v949, %v951
        %v953 = vrot.slane %v945, %v952
        %v955 = vunpack.c.l.s4 1934713408
        %v956 = vunpack.c.0.s8 %v955
        %v957 = vlaneseq
        %v958 = vshrl.u32 %v957, 7
        %v959 = vsub.s32 %v956, %v958
        %v960 = vrot.slane %v946, %v959
        %v961 = vcombine.low %v905, %v921
        %v962 = vcombine.high %v905, %v921
        %v964 = vunpack.c.l.s4 1934713408
        %v965 = vunpack.c.0.s8 %v964
        %v966 = vlaneseq
        %v967 = vshrl.u32 %v966, 7
        %v968 = vsub.s32 %v965, %v967
        %v969 = vrot.slane %v961, %v968
        %v971 = vunpack.c.l.s4 1934713408
        %v972 = vunpack.c.0.s8 %v971
        %v973 = vlaneseq
        %v974 = vshrl.u32 %v973, 7
        %v975 = vsub.s32 %v972, %v974
        %v976 = vrot.slane %v962, %v975
        %v977 = vcombine.low %v912, %v928
        %v978 = vcombine.high %v912, %v928
        %v980 = vunpack.c.l.s4 1934713408
        %v981 = vunpack.c.0.s8 %v980
        %v982 = vlaneseq
        %v983 = vshrl.u32 %v982, 7
        %v984 = vsub.s32 %v981, %v983
        %v985 = vrot.slane %v977, %v984
        %v987 = vunpack.c.l.s4 1934713408
        %v988 = vunpack.c.0.s8 %v987
        %v989 = vlaneseq
        %v990 = vshrl.u32 %v989, 7
        %v991 = vsub.s32 %v988, %v990
        %v992 = vrot.slane %v978, %v991
        %v993 = vcombine.low %v937, %v969
        %v994 = vcombine.high %v937, %v969
        %v995 = vcombine.low %v944, %v976
        %v996 = vcombine.high %v944, %v976
        %v997 = vcombine.low %v953, %v985
        %v998 = vcombine.high %v953, %v985
        %v999 = vcombine.low %v960, %v992
        %v1000 = vcombine.high %v960, %v992
        %1001 = vxpose.xlu0.b32.start [1/16] %v993, 128
        %1002 = vxpose.xlu0.b32.cont [2/16] 0.0, 128
        %1003 = vxpose.xlu0.b32.cont [3/16] 0.0, 128
        %1004 = vxpose.xlu0.b32.cont [4/16] 0.0, 128
        %1005 = vxpose.xlu0.b32.cont [5/16] 0.0, 128
        %1006 = vxpose.xlu0.b32.cont [6/16] 0.0, 128
        %1007 = vxpose.xlu0.b32.cont [7/16] 0.0, 128
        %1008 = vxpose.xlu0.b32.cont [8/16] 0.0, 128
        %1009 = vxpose.xlu0.b32.cont [9/16] 0.0, 128
        %1010 = vxpose.xlu0.b32.cont [10/16] 0.0, 128
        %1011 = vxpose.xlu0.b32.cont [11/16] 0.0, 128
        %1012 = vxpose.xlu0.b32.cont [12/16] 0.0, 128
        %1013 = vxpose.xlu0.b32.cont [13/16] 0.0, 128
        %1014 = vxpose.xlu0.b32.cont [14/16] 0.0, 128
        %1015 = vxpose.xlu0.b32.cont [15/16] 0.0, 128
        %1016 = vxpose.xlu0.b32.end [16/16] 0.0, 128
        %v1017 = vpop.trf.xlu0
        %v1018 = vpop.trf.xlu0
        %v1019 = vpop.trf.xlu0
        %v1020 = vpop.trf.xlu0
        %v1021 = vpop.trf.xlu0
        %v1022 = vpop.trf.xlu0
        %v1023 = vpop.trf.xlu0
        %v1024 = vpop.trf.xlu0
        %v1025 = vpop.trf.xlu0
        %v1026 = vpop.trf.xlu0
        %v1027 = vpop.trf.xlu0
        %v1028 = vpop.trf.xlu0
        %v1029 = vpop.trf.xlu0
        %v1030 = vpop.trf.xlu0
        %v1031 = vpop.trf.xlu0
        %v1032 = vpop.trf.xlu0
        %1033 = vxpose.xlu0.b32.start [1/16] %v994, 128
        %1034 = vxpose.xlu0.b32.cont [2/16] 0.0, 128
        %1035 = vxpose.xlu0.b32.cont [3/16] 0.0, 128
        %1036 = vxpose.xlu0.b32.cont [4/16] 0.0, 128
        %1037 = vxpose.xlu0.b32.cont [5/16] 0.0, 128
        %1038 = vxpose.xlu0.b32.cont [6/16] 0.0, 128
        %1039 = vxpose.xlu0.b32.cont [7/16] 0.0, 128
        %1040 = vxpose.xlu0.b32.cont [8/16] 0.0, 128
        %1041 = vxpose.xlu0.b32.cont [9/16] 0.0, 128
        %1042 = vxpose.xlu0.b32.cont [10/16] 0.0, 128
        %1043 = vxpose.xlu0.b32.cont [11/16] 0.0, 128
        %1044 = vxpose.xlu0.b32.cont [12/16] 0.0, 128
        %1045 = vxpose.xlu0.b32.cont [13/16] 0.0, 128
        %1046 = vxpose.xlu0.b32.cont [14/16] 0.0, 128
        %1047 = vxpose.xlu0.b32.cont [15/16] 0.0, 128
        %1048 = vxpose.xlu0.b32.end [16/16] 0.0, 128
        %v1049 = vpop.trf.xlu0
        %v1050 = vpop.trf.xlu0
        %v1051 = vpop.trf.xlu0
        %v1052 = vpop.trf.xlu0
        %v1053 = vpop.trf.xlu0
        %v1054 = vpop.trf.xlu0
        %v1055 = vpop.trf.xlu0
        %v1056 = vpop.trf.xlu0
        %v1057 = vpop.trf.xlu0
        %v1058 = vpop.trf.xlu0
        %v1059 = vpop.trf.xlu0
        %v1060 = vpop.trf.xlu0
        %v1061 = vpop.trf.xlu0
        %v1062 = vpop.trf.xlu0
        %v1063 = vpop.trf.xlu0
        %v1064 = vpop.trf.xlu0
        %1065 = vxpose.xlu0.b32.start [1/16] %v995, 128
        %1066 = vxpose.xlu0.b32.cont [2/16] 0.0, 128
        %1067 = vxpose.xlu0.b32.cont [3/16] 0.0, 128
        %1068 = vxpose.xlu0.b32.cont [4/16] 0.0, 128
        %1069 = vxpose.xlu0.b32.cont [5/16] 0.0, 128
        %1070 = vxpose.xlu0.b32.cont [6/16] 0.0, 128
        %1071 = vxpose.xlu0.b32.cont [7/16] 0.0, 128
        %1072 = vxpose.xlu0.b32.cont [8/16] 0.0, 128
        %1073 = vxpose.xlu0.b32.cont [9/16] 0.0, 128
        %1074 = vxpose.xlu0.b32.cont [10/16] 0.0, 128
        %1075 = vxpose.xlu0.b32.cont [11/16] 0.0, 128
        %1076 = vxpose.xlu0.b32.cont [12/16] 0.0, 128
        %1077 = vxpose.xlu0.b32.cont [13/16] 0.0, 128
        %1078 = vxpose.xlu0.b32.cont [14/16] 0.0, 128
        %1079 = vxpose.xlu0.b32.cont [15/16] 0.0, 128
        %1080 = vxpose.xlu0.b32.end [16/16] 0.0, 128
        %v1081 = vpop.trf.xlu0
        %v1082 = vpop.trf.xlu0
        %v1083 = vpop.trf.xlu0
        %v1084 = vpop.trf.xlu0
        %v1085 = vpop.trf.xlu0
        %v1086 = vpop.trf.xlu0
        %v1087 = vpop.trf.xlu0
        %v1088 = vpop.trf.xlu0
        %v1089 = vpop.trf.xlu0
        %v1090 = vpop.trf.xlu0
        %v1091 = vpop.trf.xlu0
        %v1092 = vpop.trf.xlu0
        %v1093 = vpop.trf.xlu0
        %v1094 = vpop.trf.xlu0
        %v1095 = vpop.trf.xlu0
        %v1096 = vpop.trf.xlu0
        %1097 = vxpose.xlu0.b32.start [1/16] %v996, 128
        %1098 = vxpose.xlu0.b32.cont [2/16] 0.0, 128
        %1099 = vxpose.xlu0.b32.cont [3/16] 0.0, 128
        %1100 = vxpose.xlu0.b32.cont [4/16] 0.0, 128
        %1101 = vxpose.xlu0.b32.cont [5/16] 0.0, 128
        %1102 = vxpose.xlu0.b32.cont [6/16] 0.0, 128
        %1103 = vxpose.xlu0.b32.cont [7/16] 0.0, 128
        %1104 = vxpose.xlu0.b32.cont [8/16] 0.0, 128
        %1105 = vxpose.xlu0.b32.cont [9/16] 0.0, 128
        %1106 = vxpose.xlu0.b32.cont [10/16] 0.0, 128
        %1107 = vxpose.xlu0.b32.cont [11/16] 0.0, 128
        %1108 = vxpose.xlu0.b32.cont [12/16] 0.0, 128
        %1109 = vxpose.xlu0.b32.cont [13/16] 0.0, 128
        %1110 = vxpose.xlu0.b32.cont [14/16] 0.0, 128
        %1111 = vxpose.xlu0.b32.cont [15/16] 0.0, 128
        %1112 = vxpose.xlu0.b32.end [16/16] 0.0, 128
        %v1113 = vpop.trf.xlu0
        %v1114 = vpop.trf.xlu0
        %v1115 = vpop.trf.xlu0
        %v1116 = vpop.trf.xlu0
        %v1117 = vpop.trf.xlu0
        %v1118 = vpop.trf.xlu0
        %v1119 = vpop.trf.xlu0
        %v1120 = vpop.trf.xlu0
        %v1121 = vpop.trf.xlu0
        %v1122 = vpop.trf.xlu0
        %v1123 = vpop.trf.xlu0
        %v1124 = vpop.trf.xlu0
        %v1125 = vpop.trf.xlu0
        %v1126 = vpop.trf.xlu0
        %v1127 = vpop.trf.xlu0
        %v1128 = vpop.trf.xlu0
        %1129 = vxpose.xlu0.b32.start [1/16] %v997, 128
        %1130 = vxpose.xlu0.b32.cont [2/16] 0.0, 128
        %1131 = vxpose.xlu0.b32.cont [3/16] 0.0, 128
        %1132 = vxpose.xlu0.b32.cont [4/16] 0.0, 128
        %1133 = vxpose.xlu0.b32.cont [5/16] 0.0, 128
        %1134 = vxpose.xlu0.b32.cont [6/16] 0.0, 128
        %1135 = vxpose.xlu0.b32.cont [7/16] 0.0, 128
        %1136 = vxpose.xlu0.b32.cont [8/16] 0.0, 128
        %1137 = vxpose.xlu0.b32.cont [9/16] 0.0, 128
        %1138 = vxpose.xlu0.b32.cont [10/16] 0.0, 128
        %1139 = vxpose.xlu0.b32.cont [11/16] 0.0, 128
        %1140 = vxpose.xlu0.b32.cont [12/16] 0.0, 128
        %1141 = vxpose.xlu0.b32.cont [13/16] 0.0, 128
        %1142 = vxpose.xlu0.b32.cont [14/16] 0.0, 128
        %1143 = vxpose.xlu0.b32.cont [15/16] 0.0, 128
        %1144 = vxpose.xlu0.b32.end [16/16] 0.0, 128
        %v1145 = vpop.trf.xlu0
        %v1146 = vpop.trf.xlu0
        %v1147 = vpop.trf.xlu0
        %v1148 = vpop.trf.xlu0
        %v1149 = vpop.trf.xlu0
        %v1150 = vpop.trf.xlu0
        %v1151 = vpop.trf.xlu0
        %v1152 = vpop.trf.xlu0
        %v1153 = vpop.trf.xlu0
        %v1154 = vpop.trf.xlu0
        %v1155 = vpop.trf.xlu0
        %v1156 = vpop.trf.xlu0
        %v1157 = vpop.trf.xlu0
        %v1158 = vpop.trf.xlu0
        %v1159 = vpop.trf.xlu0
        %v1160 = vpop.trf.xlu0
        %1161 = vxpose.xlu0.b32.start [1/16] %v998, 128
        %1162 = vxpose.xlu0.b32.cont [2/16] 0.0, 128
        %1163 = vxpose.xlu0.b32.cont [3/16] 0.0, 128
        %1164 = vxpose.xlu0.b32.cont [4/16] 0.0, 128
        %1165 = vxpose.xlu0.b32.cont [5/16] 0.0, 128
        %1166 = vxpose.xlu0.b32.cont [6/16] 0.0, 128
        %1167 = vxpose.xlu0.b32.cont [7/16] 0.0, 128
        %1168 = vxpose.xlu0.b32.cont [8/16] 0.0, 128
        %1169 = vxpose.xlu0.b32.cont [9/16] 0.0, 128
        %1170 = vxpose.xlu0.b32.cont [10/16] 0.0, 128
        %1171 = vxpose.xlu0.b32.cont [11/16] 0.0, 128
        %1172 = vxpose.xlu0.b32.cont [12/16] 0.0, 128
        %1173 = vxpose.xlu0.b32.cont [13/16] 0.0, 128
        %1174 = vxpose.xlu0.b32.cont [14/16] 0.0, 128
        %1175 = vxpose.xlu0.b32.cont [15/16] 0.0, 128
        %1176 = vxpose.xlu0.b32.end [16/16] 0.0, 128
        %v1177 = vpop.trf.xlu0
        %v1178 = vpop.trf.xlu0
        %v1179 = vpop.trf.xlu0
        %v1180 = vpop.trf.xlu0
        %v1181 = vpop.trf.xlu0
        %v1182 = vpop.trf.xlu0
        %v1183 = vpop.trf.xlu0
        %v1184 = vpop.trf.xlu0
        %v1185 = vpop.trf.xlu0
        %v1186 = vpop.trf.xlu0
        %v1187 = vpop.trf.xlu0
        %v1188 = vpop.trf.xlu0
        %v1189 = vpop.trf.xlu0
        %v1190 = vpop.trf.xlu0
        %v1191 = vpop.trf.xlu0
        %v1192 = vpop.trf.xlu0
        %1193 = vxpose.xlu0.b32.start [1/16] %v999, 128
        %1194 = vxpose.xlu0.b32.cont [2/16] 0.0, 128
        %1195 = vxpose.xlu0.b32.cont [3/16] 0.0, 128
        %1196 = vxpose.xlu0.b32.cont [4/16] 0.0, 128
        %1197 = vxpose.xlu0.b32.cont [5/16] 0.0, 128
        %1198 = vxpose.xlu0.b32.cont [6/16] 0.0, 128
        %1199 = vxpose.xlu0.b32.cont [7/16] 0.0, 128
        %1200 = vxpose.xlu0.b32.cont [8/16] 0.0, 128
        %1201 = vxpose.xlu0.b32.cont [9/16] 0.0, 128
        %1202 = vxpose.xlu0.b32.cont [10/16] 0.0, 128
        %1203 = vxpose.xlu0.b32.cont [11/16] 0.0, 128
        %1204 = vxpose.xlu0.b32.cont [12/16] 0.0, 128
        %1205 = vxpose.xlu0.b32.cont [13/16] 0.0, 128
        %1206 = vxpose.xlu0.b32.cont [14/16] 0.0, 128
        %1207 = vxpose.xlu0.b32.cont [15/16] 0.0, 128
        %1208 = vxpose.xlu0.b32.end [16/16] 0.0, 128
        %v1209 = vpop.trf.xlu0
        %v1210 = vpop.trf.xlu0
        %v1211 = vpop.trf.xlu0
        %v1212 = vpop.trf.xlu0
        %v1213 = vpop.trf.xlu0
        %v1214 = vpop.trf.xlu0
        %v1215 = vpop.trf.xlu0
        %v1216 = vpop.trf.xlu0
        %v1217 = vpop.trf.xlu0
        %v1218 = vpop.trf.xlu0
        %v1219 = vpop.trf.xlu0
        %v1220 = vpop.trf.xlu0
        %v1221 = vpop.trf.xlu0
        %v1222 = vpop.trf.xlu0
        %v1223 = vpop.trf.xlu0
        %v1224 = vpop.trf.xlu0
        %1225 = vxpose.xlu0.b32.start [1/16] %v1000, 128
        %1226 = vxpose.xlu0.b32.cont [2/16] 0.0, 128
        %1227 = vxpose.xlu0.b32.cont [3/16] 0.0, 128
        %1228 = vxpose.xlu0.b32.cont [4/16] 0.0, 128
        %1229 = vxpose.xlu0.b32.cont [5/16] 0.0, 128
        %1230 = vxpose.xlu0.b32.cont [6/16] 0.0, 128
        %1231 = vxpose.xlu0.b32.cont [7/16] 0.0, 128
        %1232 = vxpose.xlu0.b32.cont [8/16] 0.0, 128
        %1233 = vxpose.xlu0.b32.cont [9/16] 0.0, 128
        %1234 = vxpose.xlu0.b32.cont [10/16] 0.0, 128
        %1235 = vxpose.xlu0.b32.cont [11/16] 0.0, 128
        %1236 = vxpose.xlu0.b32.cont [12/16] 0.0, 128
        %1237 = vxpose.xlu0.b32.cont [13/16] 0.0, 128
        %1238 = vxpose.xlu0.b32.cont [14/16] 0.0, 128
        %1239 = vxpose.xlu0.b32.cont [15/16] 0.0, 128
        %1240 = vxpose.xlu0.b32.end [16/16] 0.0, 128
        %v1241 = vpop.trf.xlu0
        %v1242 = vpop.trf.xlu0
        %v1243 = vpop.trf.xlu0
        %v1244 = vpop.trf.xlu0
        %v1245 = vpop.trf.xlu0
        %v1246 = vpop.trf.xlu0
        %v1247 = vpop.trf.xlu0
        %v1248 = vpop.trf.xlu0
        %v1249 = vpop.trf.xlu0
        %v1250 = vpop.trf.xlu0
        %v1251 = vpop.trf.xlu0
        %v1252 = vpop.trf.xlu0
        %v1253 = vpop.trf.xlu0
        %v1254 = vpop.trf.xlu0
        %v1255 = vpop.trf.xlu0
        %v1256 = vpop.trf.xlu0
        %v1257 = vcombine.low %v1017, %v1081
        %v1259 = vunpack.c.l.s4 1983009808
        %v1260 = vunpack.c.0.s8 %v1259
        %v1261 = vlaneseq
        %v1262 = vshrl.u32 %v1261, 7
        %v1263 = vsub.s32 %v1260, %v1262
        %v1264 = vrot.slane %v1257, %v1263
        %v1265 = vcombine.low %v1049, %v1113
        %v1267 = vunpack.c.l.s4 1983009808
        %v1268 = vunpack.c.0.s8 %v1267
        %v1269 = vlaneseq
        %v1270 = vshrl.u32 %v1269, 7
        %v1271 = vsub.s32 %v1268, %v1270
        %v1272 = vrot.slane %v1265, %v1271
        %v1273 = vcombine.low %v1145, %v1209
        %v1275 = vunpack.c.l.s4 1983009808
        %v1276 = vunpack.c.0.s8 %v1275
        %v1277 = vlaneseq
        %v1278 = vshrl.u32 %v1277, 7
        %v1279 = vsub.s32 %v1276, %v1278
        %v1280 = vrot.slane %v1273, %v1279
        %v1281 = vcombine.low %v1177, %v1241
        %v1283 = vunpack.c.l.s4 1983009808
        %v1284 = vunpack.c.0.s8 %v1283
        %v1285 = vlaneseq
        %v1286 = vshrl.u32 %v1285, 7
        %v1287 = vsub.s32 %v1284, %v1286
        %v1288 = vrot.slane %v1281, %v1287
        %v1289 = vcombine.low %v1264, %v1272
        %v1290 = vcombine.high %v1264, %v1272
        %v1292 = vunpack.c.l.s4 1934713408
        %v1293 = vunpack.c.0.s8 %v1292
        %v1294 = vlaneseq
        %v1295 = vshrl.u32 %v1294, 7
        %v1296 = vsub.s32 %v1293, %v1295
        %v1297 = vrot.slane %v1289, %v1296
        %v1299 = vunpack.c.l.s4 1934713408
        %v1300 = vunpack.c.0.s8 %v1299
        %v1301 = vlaneseq
        %v1302 = vshrl.u32 %v1301, 7
        %v1303 = vsub.s32 %v1300, %v1302
        %v1304 = vrot.slane %v1290, %v1303
        %v1305 = vcombine.low %v1280, %v1288
        %v1306 = vcombine.high %v1280, %v1288
        %v1308 = vunpack.c.l.s4 1934713408
        %v1309 = vunpack.c.0.s8 %v1308
        %v1310 = vlaneseq
        %v1311 = vshrl.u32 %v1310, 7
        %v1312 = vsub.s32 %v1309, %v1311
        %v1313 = vrot.slane %v1305, %v1312
        %v1315 = vunpack.c.l.s4 1934713408
        %v1316 = vunpack.c.0.s8 %v1315
        %v1317 = vlaneseq
        %v1318 = vshrl.u32 %v1317, 7
        %v1319 = vsub.s32 %v1316, %v1318
        %v1320 = vrot.slane %v1306, %v1319
        %v1321 = vcombine.low %v1297, %v1313
        %v1322 = vcombine.high %v1297, %v1313
        %v1323 = vcombine.low %v1304, %v1320
        %v1324 = vcombine.high %v1304, %v1320
        %v1325 = vpack.c.bf16 %v1321, %v1321
        %v1326 = vpack.c.bf16 %v1322, %v1322
        %v1327 = vpack.c.bf16 %v1323, %v1323
        %v1328 = vpack.c.bf16 %v1324, %v1324
        %vm1329 = vcmask 60416
        %1330 = vst.msk [vmem:[%s385] sm:$0xf] %vm1329, %v1325
        %1331 = vst.msk [vmem:[%s385 + $0x4] sm:$0xf] %vm1329, %v1326
        %1332 = vst.msk [vmem:[%s385 + $0x8] sm:$0xf] %vm1329, %v1327
        %1333 = vst.msk [vmem:[%s385 + $0xc] sm:$0xf] %vm1329, %v1328
        %1335 = vrot.lane.b32.xlu0 %v526, 120
        %v1336 = vpop.permute.xlu0 %1335
        %1338 = vrot.lane.b32.xlu0 %v526, 112
        %v1339 = vpop.permute.xlu0 %1338
        %1341 = vrot.lane.b32.xlu0 %v526, 104
        %v1342 = vpop.permute.xlu0 %1341
        %v1344 = vcombine.low %v526, %v1339
        %v1345 = vcombine.high %v526, %v1339
        %v1347 = vunpack.c.l.s4 1983009808
        %v1348 = vunpack.c.0.s8 %v1347
        %v1349 = vlaneseq
        %v1350 = vshrl.u32 %v1349, 7
        %v1351 = vsub.s32 %v1348, %v1350
        %v1352 = vrot.slane %v1344, %v1351
        %v1354 = vunpack.c.l.s4 1983009808
        %v1355 = vunpack.c.0.s8 %v1354
        %v1356 = vlaneseq
        %v1357 = vshrl.u32 %v1356, 7
        %v1358 = vsub.s32 %v1355, %v1357
        %v1359 = vrot.slane %v1345, %v1358
        %v1360 = vcombine.low %v1336, %v1342
        %v1361 = vcombine.high %v1336, %v1342
        %v1363 = vunpack.c.l.s4 1983009808
        %v1364 = vunpack.c.0.s8 %v1363
        %v1365 = vlaneseq
        %v1366 = vshrl.u32 %v1365, 7
        %v1367 = vsub.s32 %v1364, %v1366
        %v1368 = vrot.slane %v1360, %v1367
        %v1370 = vunpack.c.l.s4 1983009808
        %v1371 = vunpack.c.0.s8 %v1370
        %v1372 = vlaneseq
        %v1373 = vshrl.u32 %v1372, 7
        %v1374 = vsub.s32 %v1371, %v1373
        %v1375 = vrot.slane %v1361, %v1374
        %v1376 = vcombine.low %v1352, %v1368
        %v1377 = vcombine.high %v1352, %v1368
        %v1379 = vunpack.c.l.s4 1934713408
        %v1380 = vunpack.c.0.s8 %v1379
        %v1381 = vlaneseq
        %v1382 = vshrl.u32 %v1381, 7
        %v1383 = vsub.s32 %v1380, %v1382
        %v1384 = vrot.slane %v1376, %v1383
        %v1386 = vunpack.c.l.s4 1934713408
        %v1387 = vunpack.c.0.s8 %v1386
        %v1388 = vlaneseq
        %v1389 = vshrl.u32 %v1388, 7
        %v1390 = vsub.s32 %v1387, %v1389
        %v1391 = vrot.slane %v1377, %v1390
        %v1392 = vcombine.low %v1359, %v1375
        %v1393 = vcombine.high %v1359, %v1375
        %v1395 = vunpack.c.l.s4 1934713408
        %v1396 = vunpack.c.0.s8 %v1395
        %v1397 = vlaneseq
        %v1398 = vshrl.u32 %v1397, 7
        %v1399 = vsub.s32 %v1396, %v1398
        %v1400 = vrot.slane %v1392, %v1399
        %v1402 = vunpack.c.l.s4 1934713408
        %v1403 = vunpack.c.0.s8 %v1402
        %v1404 = vlaneseq
        %v1405 = vshrl.u32 %v1404, 7
        %v1406 = vsub.s32 %v1403, %v1405
        %v1407 = vrot.slane %v1393, %v1406
        %v1408 = vcombine.high %v1384, 0.0
        %v1409 = vcombine.high %v1391, 0.0
        %v1410 = vcombine.high %v1400, 0.0
        %v1411 = vcombine.high %v1407, 0.0
        %v1412 = vcombine.low %v1384, %v1391
        %v1414 = vunpack.c.l.s4 1983009808
        %v1415 = vunpack.c.0.s8 %v1414
        %v1416 = vlaneseq
        %v1417 = vshrl.u32 %v1416, 7
        %v1418 = vsub.s32 %v1415, %v1417
        %v1419 = vrot.slane %v1412, %v1418
        %v1420 = vcombine.low %v1408, %v1409
        %v1422 = vunpack.c.l.s4 1983009808
        %v1423 = vunpack.c.0.s8 %v1422
        %v1424 = vlaneseq
        %v1425 = vshrl.u32 %v1424, 7
        %v1426 = vsub.s32 %v1423, %v1425
        %v1427 = vrot.slane %v1420, %v1426
        %v1428 = vcombine.low %v1400, %v1407
        %v1430 = vunpack.c.l.s4 1983009808
        %v1431 = vunpack.c.0.s8 %v1430
        %v1432 = vlaneseq
        %v1433 = vshrl.u32 %v1432, 7
        %v1434 = vsub.s32 %v1431, %v1433
        %v1435 = vrot.slane %v1428, %v1434
        %v1436 = vcombine.low %v1410, %v1411
        %v1438 = vunpack.c.l.s4 1983009808
        %v1439 = vunpack.c.0.s8 %v1438
        %v1440 = vlaneseq
        %v1441 = vshrl.u32 %v1440, 7
        %v1442 = vsub.s32 %v1439, %v1441
        %v1443 = vrot.slane %v1436, %v1442
        %v1444 = vcombine.low %v1419, %v1427
        %v1445 = vcombine.high %v1419, %v1427
        %v1447 = vunpack.c.l.s4 1934713408
        %v1448 = vunpack.c.0.s8 %v1447
        %v1449 = vlaneseq
        %v1450 = vshrl.u32 %v1449, 7
        %v1451 = vsub.s32 %v1448, %v1450
        %v1452 = vrot.slane %v1444, %v1451
        %v1454 = vunpack.c.l.s4 1934713408
        %v1455 = vunpack.c.0.s8 %v1454
        %v1456 = vlaneseq
        %v1457 = vshrl.u32 %v1456, 7
        %v1458 = vsub.s32 %v1455, %v1457
        %v1459 = vrot.slane %v1445, %v1458
        %v1460 = vcombine.low %v1435, %v1443
        %v1461 = vcombine.high %v1435, %v1443
        %v1463 = vunpack.c.l.s4 1934713408
        %v1464 = vunpack.c.0.s8 %v1463
        %v1465 = vlaneseq
        %v1466 = vshrl.u32 %v1465, 7
        %v1467 = vsub.s32 %v1464, %v1466
        %v1468 = vrot.slane %v1460, %v1467
        %v1470 = vunpack.c.l.s4 1934713408
        %v1471 = vunpack.c.0.s8 %v1470
        %v1472 = vlaneseq
        %v1473 = vshrl.u32 %v1472, 7
        %v1474 = vsub.s32 %v1471, %v1473
        %v1475 = vrot.slane %v1461, %v1474
        %v1476 = vcombine.low %v1452, %v1468
        %v1477 = vcombine.high %v1452, %v1468
        %v1478 = vcombine.low %v1459, %v1475
        %v1479 = vcombine.high %v1459, %v1475
        %v1480 = vpack.c.bf16 %v1476, %v1476
        %v1481 = vpack.c.bf16 %v1477, %v1477
        %v1482 = vpack.c.bf16 %v1478, %v1478
        %v1483 = vpack.c.bf16 %v1479, %v1479
        %1484 = vst.msk [vmem:[%s392] sm:$0xf] %vm1329, %v1480
        %1485 = vst.msk [vmem:[%s392 + $0x4] sm:$0xf] %vm1329, %v1481
        %1486 = vst.msk [vmem:[%s392 + $0x8] sm:$0xf] %vm1329, %v1482
        %1487 = vst.msk [vmem:[%s392 + $0xc] sm:$0xf] %vm1329, %v1483
        %s1488 = sand.u32 %s194, 1
        %s1489 = scalar_lea.sflag [#allocation4], %s1488
        %s1490 = sand.u32 %s194, 1
        %s1491 = smul.addr %s1490, 16
        %s1492 = scalar_lea.vmem [#allocation10], %s1491
        %s1493 = sand.u32 %s222, 1
        %s1494 = scalar_lea.sflag [#allocation12], %s1493
        %s1495 = sand.u32 %s222, 1
        %s1496 = smul.addr %s1495, 16
        %s1497 = scalar_lea.vmem [#allocation11], %s1496
        // Predicated region
        $region61: #{tpu_custom_call.1} parent=43 // pred_check
          %p1498 = pneg %p204
        $region62: #{tpu_custom_call.1} parent=43 // pred_check_branch
          %1500 = sbr.rel (%p1498) target = $region64
        $region63: #{tpu_custom_call.1} parent=43 // pred_region
          %s1502 = ssub.s32 256, 256
          %1503 = vsyncadd %s1489, %s1502
          %s1504 = smul.addr %s36, 4
          %s1505 = sadd.s32 %s37, %s1504
          %s1506 = smul.addr %s1505, 64
          %s1507 = scalar_lea.hbm %s6, %s1506
          %s1508 = sshll.u32 %s1492, 4
          %s1509 = int_to_ptr.vmem [resolvable:$true] %s1508
          %1514 = dma.vmem_to_hbm [thread:$0]  %s1509, 256, %s1507, %s1489, 64, 64, 4
        $region64: #{tpu_custom_call.1} parent=43 // pred_fallthru
          _
        // Predicated region
        $region65: #{tpu_custom_call.1} parent=43 // pred_check
          %p1515 = pneg %p232
        $region66: #{tpu_custom_call.1} parent=43 // pred_check_branch
          %1517 = sbr.rel (%p1515) target = $region68
        $region67: #{tpu_custom_call.1} parent=43 // pred_region
          %s1519 = ssub.s32 256, 256
          %1520 = vsyncadd %s1494, %s1519
          %s1521 = smul.addr %s36, 4
          %s1522 = sadd.s32 %s37, %s1521
          %s1523 = smul.addr %s1522, 64
          %s1524 = scalar_lea.hbm %s7, %s1523
          %s1525 = sshll.u32 %s1497, 4
          %s1526 = int_to_ptr.vmem [resolvable:$true] %s1525
          %1531 = dma.vmem_to_hbm [thread:$0]  %s1526, 256, %s1524, %s1494, 64, 64, 4
        $region68: #{tpu_custom_call.1} parent=43 // pred_fallthru
          _
      $region44: #{tpu_custom_call.1} parent=5 // pred_fallthru
        _
      %p1532 = scmp.le.s32.totalorder 2, %s27
      // Predicated region
      $region69: #{tpu_custom_call.1} parent=5 // pred_check
        %p1533 = pneg %p1532
      $region70: #{tpu_custom_call.1} parent=5 // pred_check_branch
        %1535 = sbr.rel (%p1533) target = $region72
      $region71: #{tpu_custom_call.1} parent=5 // pred_region
        %s1536 = ssub.s32 %s27, 2
        // Predicated region
        $region73: #{tpu_custom_call.1} parent=71 // pred_check
          %p1537 = pneg %p210
        $region74: #{tpu_custom_call.1} parent=71 // pred_check_branch
          %1539 = sbr.rel (%p1537) target = $region76
        $region75: #{tpu_custom_call.1} parent=71 // pred_region
          %s1540 = sand.u32 %s195, 1
          %s1541 = scalar_lea.sflag [#allocation4], %s1540
          %s1542 = sand.u32 %s195, 1
          %s1543 = smul.addr %s1542, 16
          %s1544 = scalar_lea.vmem [#allocation10], %s1543
          %1545 = dma.done %s1541, 256
        $region76: #{tpu_custom_call.1} parent=71 // pred_fallthru
          _
        // Predicated region
        $region77: #{tpu_custom_call.1} parent=71 // pred_check
          %p1546 = pneg %p238
        $region78: #{tpu_custom_call.1} parent=71 // pred_check_branch
          %1548 = sbr.rel (%p1546) target = $region80
        $region79: #{tpu_custom_call.1} parent=71 // pred_region
          %s1549 = sand.u32 %s223, 1
          %s1550 = scalar_lea.sflag [#allocation12], %s1549
          %s1551 = sand.u32 %s223, 1
          %s1552 = smul.addr %s1551, 16
          %s1553 = scalar_lea.vmem [#allocation11], %s1552
          %1554 = dma.done %s1550, 256
        $region80: #{tpu_custom_call.1} parent=71 // pred_fallthru
          _
      $region72: #{tpu_custom_call.1} parent=5 // pred_fallthru
        _
    $region6: #{tpu_custom_call.1} parent=1 // loop_footer
      %s31 = sadd.s32 1, %s27
    $region7: #{tpu_custom_call.1} parent=1 // loop_footer_branch
      %26 = sbr.rel target = $region3
    $region8: #{tpu_custom_call.1} parent=1 // loop_exit
      _
    %1555 = vsyncpa [#allocation3], 1
    %s1556 = scalar_lea.sflag [#allocation3], 1
    %1557 = vsyncpa %s1556, 1
    %1558 = vsyncpa [#allocation6], 1
    %s1559 = scalar_lea.sflag [#allocation6], 1
    %1560 = vsyncpa %s1559, 1
    %1561 = vsyncpa [#allocation9], 1
    %1562 = vsyncpa [#allocation4], 1
    %s1563 = scalar_lea.sflag [#allocation4], 1
    %1564 = vsyncpa %s1563, 1
    %1565 = vsyncpa [#allocation12], 1
    %s1566 = scalar_lea.sflag [#allocation12], 1
    %1567 = vsyncpa %s1566, 1

</llo_original>
